<compile_context>
chip_gen: v7x
topology: tpu7x:2x2x1
jax: 0.10.0
libtpu: 0.0.40
codegen_flags: <defaults>
</compile_context>

<pallas_src>
import jax
import jax.numpy as jnp
from jax.experimental import pallas as pl
from jax.experimental.pallas import tpu as pltpu


def _round_up(n: int, m: int) -> int:
    return ((n + m - 1) // m) * m


def generator_kernel(x_ref, w1_ref, b1_ref, w2_ref, b2_ref, o_ref):
    # Layer 1: (block_b, z_dim) @ (z_dim, hidden) on the MXU, f32 accumulation.
    h = jnp.dot(
        x_ref[...].astype(jnp.bfloat16),
        w1_ref[...],
        preferred_element_type=jnp.float32,
    )
    h = h + b1_ref[...]                       # (block_b, hidden) + (1, hidden)
    # LeakyReLU(0.1): single VPU max instead of cmp+select.
    h = jnp.maximum(h, 0.1 * h)
    # Layer 2: (block_b, hidden) @ (hidden, img_dim) on the MXU.
    y = jnp.dot(
        h.astype(jnp.bfloat16),
        w2_ref[...],
        preferred_element_type=jnp.float32,
    )
    y = y + b2_ref[...]                       # (block_b, img_dim) + (1, img_dim)
    # Tanh output activation (EUP), f32.
    o_ref[...] = jnp.tanh(y).astype(o_ref.dtype)


def prepare_generator_params(w1, b1, w2, b2):
    """One-time parameter preprocessing (do at init, reuse every forward).

    Casts matmul weights to bf16 (halves weight HBM traffic, bf16-native MXU)
    and reshapes biases to 2-D f32 rows.  No padding is needed: all kernel
    blocks use full K / N extents.
    """
    return (
        w1.astype(jnp.bfloat16),               # (z_dim, hidden)
        b1.reshape(1, -1).astype(jnp.float32),  # (1, hidden)
        w2.astype(jnp.bfloat16),               # (hidden, img_dim)
        b2.reshape(1, -1).astype(jnp.float32),  # (1, img_dim)
    )


def generator_forward(x, prepared_params, *, block_b=128):
    """x: (B, z_dim) f32. prepared_params from prepare_generator_params().

    Computes tanh(leaky_relu(x @ w1 + b1, 0.1) @ w2 + b2) as f32.
    """
    w1_bf, b1_2d, w2_bf, b2_2d = prepared_params
    B, z_dim = x.shape
    hidden = w1_bf.shape[1]
    img_dim = w2_bf.shape[1]

    # Tile-size selection:
    #  - small batches: shrink the tile to round_up(B, 8) -> no wasted rows.
    #  - otherwise keep block_b (default 128 => >=2 grid steps at B>=256, so
    #    both v7x TensorCores get work; callers on v5e/v6e may raise it).
    if B < block_b:
        block_b = _round_up(B, 8)
    b_p = _round_up(B, block_b)

    x_p = x if b_p == B else jnp.pad(x, ((0, b_p - B), (0, 0)))

    grid = (b_p // block_b,)

    out = pl.pallas_call(
        generator_kernel,
        out_shape=jax.ShapeDtypeStruct((b_p, img_dim), jnp.float32),
        grid_spec=pltpu.PrefetchScalarGridSpec(
            num_scalar_prefetch=0,
            grid=grid,
            in_specs=[
                pl.BlockSpec((block_b, z_dim), lambda i: (i, 0)),    # x tile / step
                pl.BlockSpec((z_dim, hidden), lambda i: (0, 0)),     # w1: resident
                pl.BlockSpec((1, hidden), lambda i: (0, 0)),         # b1: resident
                pl.BlockSpec((hidden, img_dim), lambda i: (0, 0)),   # w2: resident
                pl.BlockSpec((1, img_dim), lambda i: (0, 0)),        # b2: resident
            ],
            out_specs=pl.BlockSpec((block_b, img_dim), lambda i: (i, 0)),
        ),
        compiler_params=pltpu.CompilerParams(
            dimension_semantics=("parallel",),
        ),
    )(x_p, w1_bf, b1_2d, w2_bf, b2_2d)

    return out if b_p == B else out[:B]


def generator_reference(x, w1, b1, w2, b2):
    h = x @ w1 + b1
    h = jnp.where(h > 0, h, 0.1 * h)
    y = h @ w2 + b2
    return jnp.tanh(y)


if __name__ == "__main__":
    # Shapes consistent with the module: z_dim latent -> 256 hidden -> img_dim.
    # B=256 with block_b=128 gives a 2-step parallel grid (both v7x TCs used).
    B = 256
    z_dim = 64
    hidden = 256
    img_dim = 784  # 28*28 MNIST flat image

    key = jax.random.PRNGKey(0)
    kx, kw1, kb1, kw2, kb2 = jax.random.split(key, 5)

    # Deterministic params (roughly PyTorch's U(-1/sqrt(fan_in), 1/sqrt(fan_in))).
    x = jax.random.normal(kx, (B, z_dim), dtype=jnp.float32)
    lim1 = 1.0 / jnp.sqrt(z_dim)
    w1 = jax.random.uniform(kw1, (z_dim, hidden), jnp.float32, -lim1, lim1)
    b1 = jax.random.uniform(kb1, (hidden,), jnp.float32, -lim1, lim1)
    lim2 = 1.0 / jnp.sqrt(hidden)
    w2 = jax.random.uniform(kw2, (hidden, img_dim), jnp.float32, -lim2, lim2)
    b2 = jax.random.uniform(kb2, (img_dim,), jnp.float32, -lim2, lim2)

    # One-time weight preprocessing (hoisted out of the per-call path).
    params = prepare_generator_params(w1, b1, w2, b2)
    params = jax.block_until_ready(params)

    out = generator_forward(x, params)
    out = jax.block_until_ready(out)

    ref = generator_reference(x, w1, b1, w2, b2)
    assert out.shape == (B, img_dim)
    # bf16 weights / bf16 matmul operands -> allow ~1e-2 level deviation vs f32 ref.
    assert jnp.allclose(out, ref, atol=3e-2, rtol=0.0), float(
        jnp.max(jnp.abs(out - ref))
    )

    print("KERNEL_OK")
</pallas_src>

<mosaic_0001>
module attributes {stable_mosaic.version = 11 : i64} {
  func.func @generator_kernel(%arg0: i32, %arg1: memref<128x64xf32, #tpu.memory_space<vmem>>, %arg2: memref<64x256xbf16, #tpu.memory_space<vmem>>, %arg3: memref<1x256xf32, #tpu.memory_space<vmem>>, %arg4: memref<256x784xbf16, #tpu.memory_space<vmem>>, %arg5: memref<1x784xf32, #tpu.memory_space<vmem>>, %arg6: memref<128x784xf32, #tpu.memory_space<vmem>>) attributes {dimension_semantics = [#tpu.dimension_semantics<parallel>], iteration_bounds = array<i64: 2>, scalar_prefetch = 0 : i64, scratch_operands = 0 : i64, tpu.core_type = #tpu.core_type<tc>, window_params = [{transform_indices = @transform_0, window_bounds = array<i64: 128, 64>}, {pipeline_mode = #tpu.pipeline_mode<synchronous>, transform_indices = @transform_1, window_bounds = array<i64: 64, 256>}, {pipeline_mode = #tpu.pipeline_mode<synchronous>, transform_indices = @transform_2, window_bounds = array<i64: 1, 256>}, {pipeline_mode = #tpu.pipeline_mode<synchronous>, transform_indices = @transform_3, window_bounds = array<i64: 256, 784>}, {pipeline_mode = #tpu.pipeline_mode<synchronous>, transform_indices = @transform_4, window_bounds = array<i64: 1, 784>}, {transform_indices = @transform_5, window_bounds = array<i64: 128, 784>}]} {
    %c0 = arith.constant 0 : index
    %c0_0 = arith.constant 0 : index
    %0 = vector.load %arg1[%c0, %c0_0] : memref<128x64xf32, #tpu.memory_space<vmem>>, vector<128x64xf32>
    %1 = arith.truncf %0 : vector<128x64xf32> to vector<128x64xbf16>
    %c0_1 = arith.constant 0 : index
    %c0_2 = arith.constant 0 : index
    %2 = vector.load %arg2[%c0_1, %c0_2] : memref<64x256xbf16, #tpu.memory_space<vmem>>, vector<64x256xbf16>
    %cst = arith.constant dense<0.000000e+00> : vector<128x256xf32>
    %3 = tpu.matmul %1, %2, %cst {dimension_numbers = #tpu.dot_dimension_numbers<[1], [0], [0], [1], [0, 0, 1, 1], [], []>} : vector<128x64xbf16>, vector<64x256xbf16>, vector<128x256xf32> -> vector<128x256xf32>
    %c0_3 = arith.constant 0 : index
    %c0_4 = arith.constant 0 : index
    %4 = vector.load %arg3[%c0_3, %c0_4] : memref<1x256xf32, #tpu.memory_space<vmem>>, vector<1x256xf32>
    %5 = vector.broadcast %4 : vector<1x256xf32> to vector<128x256xf32>
    %6 = arith.addf %3, %5 : vector<128x256xf32>
    %cst_5 = arith.constant 1.000000e-01 : f32
    %7 = vector.broadcast %cst_5 : f32 to vector<128x256xf32>
    %8 = arith.mulf %7, %6 : vector<128x256xf32>
    %9 = arith.maximumf %6, %8 : vector<128x256xf32>
    %10 = arith.truncf %9 : vector<128x256xf32> to vector<128x256xbf16>
    %c0_6 = arith.constant 0 : index
    %c0_7 = arith.constant 0 : index
    %11 = vector.load %arg4[%c0_6, %c0_7] : memref<256x784xbf16, #tpu.memory_space<vmem>>, vector<256x784xbf16>
    %cst_8 = arith.constant dense<0.000000e+00> : vector<128x784xf32>
    %12 = tpu.matmul %10, %11, %cst_8 {dimension_numbers = #tpu.dot_dimension_numbers<[1], [0], [0], [1], [0, 0, 1, 1], [], []>} : vector<128x256xbf16>, vector<256x784xbf16>, vector<128x784xf32> -> vector<128x784xf32>
    %c0_9 = arith.constant 0 : index
    %c0_10 = arith.constant 0 : index
    %13 = vector.load %arg5[%c0_9, %c0_10] : memref<1x784xf32, #tpu.memory_space<vmem>>, vector<1x784xf32>
    %14 = vector.broadcast %13 : vector<1x784xf32> to vector<128x784xf32>
    %15 = arith.addf %12, %14 : vector<128x784xf32>
    %16 = math.tanh %15 : vector<128x784xf32>
    %c0_11 = arith.constant 0 : index
    %c0_12 = arith.constant 0 : index
    %17 = vector.load %arg6[%c0_11, %c0_12] : memref<128x784xf32, #tpu.memory_space<vmem>>, vector<128x784xf32>
    tpu.vector_store %arg6[%c0_11, %c0_12], %16 {strides = array<i32>} : memref<128x784xf32, #tpu.memory_space<vmem>>, vector<128x784xf32>,
    return
  }
  func.func @transform_0(%arg0: i32) -> (i32, i32) {
    %c0_i32 = arith.constant 0 : i32
    %c0_i32_0 = arith.constant 0 : i32
    return %arg0, %c0_i32 : i32, i32
  }
  func.func @transform_1(%arg0: i32) -> (i32, i32) {
    %c0_i32 = arith.constant 0 : i32
    %c0_i32_0 = arith.constant 0 : i32
    %c0_i32_1 = arith.constant 0 : i32
    return %c0_i32, %c0_i32_0 : i32, i32
  }
  func.func @transform_2(%arg0: i32) -> (i32, i32) {
    %c0_i32 = arith.constant 0 : i32
    %c0_i32_0 = arith.constant 0 : i32
    %c0_i32_1 = arith.constant 0 : i32
    return %c0_i32, %c0_i32_0 : i32, i32
  }
  func.func @transform_3(%arg0: i32) -> (i32, i32) {
    %c0_i32 = arith.constant 0 : i32
    %c0_i32_0 = arith.constant 0 : i32
    %c0_i32_1 = arith.constant 0 : i32
    return %c0_i32, %c0_i32_0 : i32, i32
  }
  func.func @transform_4(%arg0: i32) -> (i32, i32) {
    %c0_i32 = arith.constant 0 : i32
    %c0_i32_0 = arith.constant 0 : i32
    %c0_i32_1 = arith.constant 0 : i32
    return %c0_i32, %c0_i32_0 : i32, i32
  }
  func.func @transform_5(%arg0: i32) -> (i32, i32) {
    %c0_i32 = arith.constant 0 : i32
    %c0_i32_0 = arith.constant 0 : i32
    return %arg0, %c0_i32 : i32, i32
  }
}

</mosaic_0001>

<llo_original>
// kernel: tpu_custom_call.1
$region0: #{tpu_custom_call.1}
  #allocation0 [shape = 'u32[]', space=smem, size = 0x4, offset = 0x4, fixed_abs, tag = 'smem constant byte address 0x4 - core index']
  #allocation1 [shape = 'u32[144,128]{1,0:T(1,128)}', space=vmem, size = 0x12000, scoped, tag = 'internal scratch']
  %s0 = inlined_call_operand.vmem [shape: f32[256,64], index: 0, kind: input, shape index: {}]
  %s1 = inlined_call_operand.vmem [shape: bf16[64,256], index: 1, kind: input, shape index: {}]
  %s2 = inlined_call_operand.vmem [shape: f32[1,256], index: 2, kind: input, shape index: {}]
  %s3 = inlined_call_operand.vmem [shape: bf16[256,784], index: 3, kind: input, shape index: {}]
  %s4 = inlined_call_operand.vmem [shape: f32[1,784], index: 4, kind: input, shape index: {}]
  %s5 = inlined_call_operand.vmem [shape: f32[256,784], index: 5, kind: output, shape index: {}]
  %s6 = sld [smem:[#allocation0]]
  $region53: #{tpu_custom_call.1} parent=0
    _
  %s8 = ssub.s32 1, %s6
  %s9 = scalar_select 0, %s8, %s6
  loop: start=0, step=1, limit=4
  $region2: #{tpu_custom_call.1} parent=0 // loop_pre_header
    _
  $region3: #{tpu_custom_call.1} parent=0 // loop_header
    %s11 = sphi 0, %s15
    %p12 = scmp.ge.s32.totalorder %s11, 4
    %s21 = sphi 0, %s23
    %s24 = sphi 0, %s21
    %s25 = sphi 0, %s24
    %s41 = sphi 0, %s25
    %s45 = sphi 0, %s45
    %s47 = sphi 0, %s45
    %s48 = sphi 0, %s47
    %s62 = sphi 0, %s48
    %s66 = sphi 0, %s66
    %s68 = sphi 0, %s66
    %s69 = sphi 0, %s68
    %s83 = sphi 0, %s69
    %s87 = sphi 0, %s87
    %s89 = sphi 0, %s87
    %s90 = sphi 0, %s89
    %s104 = sphi 0, %s90
    %s108 = sphi 0, %s108
    %s110 = sphi 0, %s108
    %s111 = sphi 0, %s110
    %s125 = sphi 0, %s111
    %s131 = sphi 0, %s133
    %s134 = sphi 0, %s131
    %s135 = sphi 0, %s134
    %s151 = sphi 0, %s135
  $region4: #{tpu_custom_call.1} parent=0 // loop_header_branch
    %14 = sbr.rel (%p12) target = $region8
  $region5: #{tpu_custom_call.1} parent=0 // loop_body
    %s16 = ssub.s32 %s11, 1
    %s17 = ssub.s32 %s11, 2
    %s18 = sadd.s32 %s11, 1
    %s19 = ssub.s32 %s11, %s18
    %p20 = scmp.eq.s32.totalorder %s19, 0
    %s22 = sadd.s32 %s21, 1
    %s23 = scalar_select %p20, %s21, %s22
    %p26 = pneg %p20
    %p27 = scmp.eq.s32.totalorder %s11, 1
    %p28 = por %p26, %p27
    %p29 = scmp.ne.s32.totalorder %s21, %s24
    %p30 = scmp.eq.s32.totalorder %s11, 0
    %p31 = por %p29, %p30
    %p32 = scmp.ne.s32.totalorder %s21, %s24
    %p33 = scmp.eq.s32.totalorder %s16, 1
    %p34 = por %p32, %p33
    %p35 = scmp.ne.s32.totalorder %s24, %s25
    %p36 = scmp.eq.s32.totalorder %s16, 0
    %p37 = por %p35, %p36
    %p38 = scmp.ne.s32.totalorder %s24, %s25
    %p39 = scmp.eq.s32.totalorder %s17, 1
    %p40 = por %p38, %p39
    %p42 = scmp.ne.s32.totalorder %s25, %s41
    %p43 = scmp.eq.s32.totalorder %s17, 0
    %p44 = por %p42, %p43
    %s46 = sadd.s32 %s45, 1
    %p49 = scmp.eq.s32.totalorder %s11, 1
    %p50 = scmp.ne.s32.totalorder %s45, %s47
    %p51 = scmp.eq.s32.totalorder %s11, 0
    %p52 = por %p50, %p51
    %p53 = scmp.ne.s32.totalorder %s45, %s47
    %p54 = scmp.eq.s32.totalorder %s16, 1
    %p55 = por %p53, %p54
    %p56 = scmp.ne.s32.totalorder %s47, %s48
    %p57 = scmp.eq.s32.totalorder %s16, 0
    %p58 = por %p56, %p57
    %p59 = scmp.ne.s32.totalorder %s47, %s48
    %p60 = scmp.eq.s32.totalorder %s17, 1
    %p61 = por %p59, %p60
    %p63 = scmp.ne.s32.totalorder %s48, %s62
    %p64 = scmp.eq.s32.totalorder %s17, 0
    %p65 = por %p63, %p64
    %s67 = sadd.s32 %s66, 1
    %p70 = scmp.eq.s32.totalorder %s11, 1
    %p71 = scmp.ne.s32.totalorder %s66, %s68
    %p72 = scmp.eq.s32.totalorder %s11, 0
    %p73 = por %p71, %p72
    %p74 = scmp.ne.s32.totalorder %s66, %s68
    %p75 = scmp.eq.s32.totalorder %s16, 1
    %p76 = por %p74, %p75
    %p77 = scmp.ne.s32.totalorder %s68, %s69
    %p78 = scmp.eq.s32.totalorder %s16, 0
    %p79 = por %p77, %p78
    %p80 = scmp.ne.s32.totalorder %s68, %s69
    %p81 = scmp.eq.s32.totalorder %s17, 1
    %p82 = por %p80, %p81
    %p84 = scmp.ne.s32.totalorder %s69, %s83
    %p85 = scmp.eq.s32.totalorder %s17, 0
    %p86 = por %p84, %p85
    %s88 = sadd.s32 %s87, 1
    %p91 = scmp.eq.s32.totalorder %s11, 1
    %p92 = scmp.ne.s32.totalorder %s87, %s89
    %p93 = scmp.eq.s32.totalorder %s11, 0
    %p94 = por %p92, %p93
    %p95 = scmp.ne.s32.totalorder %s87, %s89
    %p96 = scmp.eq.s32.totalorder %s16, 1
    %p97 = por %p95, %p96
    %p98 = scmp.ne.s32.totalorder %s89, %s90
    %p99 = scmp.eq.s32.totalorder %s16, 0
    %p100 = por %p98, %p99
    %p101 = scmp.ne.s32.totalorder %s89, %s90
    %p102 = scmp.eq.s32.totalorder %s17, 1
    %p103 = por %p101, %p102
    %p105 = scmp.ne.s32.totalorder %s90, %s104
    %p106 = scmp.eq.s32.totalorder %s17, 0
    %p107 = por %p105, %p106
    %s109 = sadd.s32 %s108, 1
    %p112 = scmp.eq.s32.totalorder %s11, 1
    %p113 = scmp.ne.s32.totalorder %s108, %s110
    %p114 = scmp.eq.s32.totalorder %s11, 0
    %p115 = por %p113, %p114
    %p116 = scmp.ne.s32.totalorder %s108, %s110
    %p117 = scmp.eq.s32.totalorder %s16, 1
    %p118 = por %p116, %p117
    %p119 = scmp.ne.s32.totalorder %s110, %s111
    %p120 = scmp.eq.s32.totalorder %s16, 0
    %p121 = por %p119, %p120
    %p122 = scmp.ne.s32.totalorder %s110, %s111
    %p123 = scmp.eq.s32.totalorder %s17, 1
    %p124 = por %p122, %p123
    %p126 = scmp.ne.s32.totalorder %s111, %s125
    %p127 = scmp.eq.s32.totalorder %s17, 0
    %p128 = por %p126, %p127
    %s129 = ssub.s32 %s11, %s18
    %p130 = scmp.eq.s32.totalorder %s129, 0
    %s132 = sadd.s32 %s131, 1
    %s133 = scalar_select %p130, %s131, %s132
    %p136 = pneg %p130
    %p137 = scmp.eq.s32.totalorder %s11, 1
    %p138 = por %p136, %p137
    %p139 = scmp.ne.s32.totalorder %s131, %s134
    %p140 = scmp.eq.s32.totalorder %s11, 0
    %p141 = por %p139, %p140
    %p142 = scmp.ne.s32.totalorder %s131, %s134
    %p143 = scmp.eq.s32.totalorder %s16, 1
    %p144 = por %p142, %p143
    %p145 = scmp.ne.s32.totalorder %s134, %s135
    %p146 = scmp.eq.s32.totalorder %s16, 0
    %p147 = por %p145, %p146
    %p148 = scmp.ne.s32.totalorder %s134, %s135
    %p149 = scmp.eq.s32.totalorder %s17, 1
    %p150 = por %p148, %p149
    %p152 = scmp.ne.s32.totalorder %s135, %s151
    %p153 = scmp.eq.s32.totalorder %s17, 0
    %p154 = por %p152, %p153
    %p155 = scmp.le.s32.totalorder 1, %s11
    %p156 = scmp.lt.s32.totalorder %s11, 3
    %p157 = pnand %p155, %p156
    %p158 = pneg %p157
    // Predicated region
    $region9: #{tpu_custom_call.1} parent=5 // pred_check
      _
    $region10: #{tpu_custom_call.1} parent=5 // pred_check_branch
      %160 = sbr.rel (%p157) target = $region12
    $region11: #{tpu_custom_call.1} parent=5 // pred_region
      %s161 = ssub.s32 %s11, 1
      // Predicated region
      $region13: #{tpu_custom_call.1} parent=11 // pred_check
        %p162 = pneg %p58
      $region14: #{tpu_custom_call.1} parent=11 // pred_check_branch
        %164 = sbr.rel (%p162) target = $region16
      $region15: #{tpu_custom_call.1} parent=11 // pred_region
        _
      $region16: #{tpu_custom_call.1} parent=11 // pred_fallthru
        _
      // Predicated region
      $region17: #{tpu_custom_call.1} parent=11 // pred_check
        %p165 = pneg %p79
      $region18: #{tpu_custom_call.1} parent=11 // pred_check_branch
        %167 = sbr.rel (%p165) target = $region20
      $region19: #{tpu_custom_call.1} parent=11 // pred_region
        _
      $region20: #{tpu_custom_call.1} parent=11 // pred_fallthru
        _
      // Predicated region
      $region21: #{tpu_custom_call.1} parent=11 // pred_check
        %p168 = pneg %p100
      $region22: #{tpu_custom_call.1} parent=11 // pred_check_branch
        %170 = sbr.rel (%p168) target = $region24
      $region23: #{tpu_custom_call.1} parent=11 // pred_region
        _
      $region24: #{tpu_custom_call.1} parent=11 // pred_fallthru
        _
      // Predicated region
      $region25: #{tpu_custom_call.1} parent=11 // pred_check
        %p171 = pneg %p121
      $region26: #{tpu_custom_call.1} parent=11 // pred_check_branch
        %173 = sbr.rel (%p171) target = $region28
      $region27: #{tpu_custom_call.1} parent=11 // pred_region
        _
      $region28: #{tpu_custom_call.1} parent=11 // pred_fallthru
        _
    $region12: #{tpu_custom_call.1} parent=5 // pred_fallthru
      _
    %p174 = scmp.lt.s32.totalorder %s11, 2
    // Predicated region
    $region29: #{tpu_custom_call.1} parent=5 // pred_check
      %p175 = pneg %p174
    $region30: #{tpu_custom_call.1} parent=5 // pred_check_branch
      %177 = sbr.rel (%p175) target = $region32
    $region31: #{tpu_custom_call.1} parent=5 // pred_region
      // Predicated region
      $region33: #{tpu_custom_call.1} parent=31 // pred_check
        %p178 = pneg %p31
      $region34: #{tpu_custom_call.1} parent=31 // pred_check_branch
        %180 = sbr.rel (%p178) target = $region36
      $region35: #{tpu_custom_call.1} parent=31 // pred_region
        %s181 = smul.u32 16, %s11
        %p182 = scmp.lt.s32.totalorder %s181, 31
        %s183 = scalar_select %p182, %s181, 31
        %s184 = smul.addr %s183, 8
        %s185 = scalar_lea.vmem %s0, %s184
        %s186 = smul.u32 16, %s11
      $region36: #{tpu_custom_call.1} parent=31 // pred_fallthru
        _
    $region32: #{tpu_custom_call.1} parent=5 // pred_fallthru
      _
    %p187 = scmp.le.s32.totalorder 1, %s11
    %p188 = scmp.lt.s32.totalorder %s11, 3
    %p189 = pnand %p187, %p188
    %p190 = pneg %p189
    // Predicated region
    $region37: #{tpu_custom_call.1} parent=5 // pred_check
      _
    $region38: #{tpu_custom_call.1} parent=5 // pred_check_branch
      %192 = sbr.rel (%p189) target = $region40
    $region39: #{tpu_custom_call.1} parent=5 // pred_region
      %s193 = ssub.s32 %s11, 1
      %s194 = smul.u32 16, %s16
      %p195 = scmp.lt.s32.totalorder %s194, 31
      %s196 = scalar_select %p195, %s194, 31
      %s197 = smul.addr %s196, 8
      %s198 = scalar_lea.vmem %s0, %s197
      %p199 = pneg %p37
      %p200 = pneg %p34
      %p201 = pneg %p58
      %p202 = pneg %p55
      %p203 = pneg %p79
      %p204 = pneg %p76
      %p205 = pneg %p100
      %p206 = pneg %p97
      %p207 = pneg %p121
      %p208 = pneg %p118
      %p209 = pneg %p147
      %p210 = pneg %p144
      %s211 = smul.u32 16, %s16
      %p212 = scmp.lt.s32.totalorder %s211, 31
      %s213 = scalar_select %p212, %s211, 31
      %s214 = smul.addr %s213, 7
      %s215 = smul.addr %s214, 8
      %s216 = scalar_lea.vmem %s5, %s215
      %s217 = smul.u32 16, %s16
      %p218 = scmp.lt.s32.totalorder %s217, 31
      %s219 = scalar_select %p218, %s217, 31
      %s220 = smul.addr %s219, 8
      %s221 = scalar_lea.vmem %s0, %s220
      %s222 = smul.u32 16, %s16
      %s223 = smul.u32 16, %s16
      %p224 = scmp.lt.s32.totalorder %s223, 31
      %s225 = scalar_select %p224, %s223, 31
      %s226 = smul.addr %s225, 7
      %s227 = smul.addr %s226, 8
      %s228 = scalar_lea.vmem %s5, %s227
      %s229 = smul.u32 16, %s16
      %v231 = vld [vmem:[%s221] sm:$0xff]
      %v232 = vld [vmem:[%s221 + $0x8] sm:$0xff]
      %v233 = vld [vmem:[%s221 + $0x10] sm:$0xff]
      %v234 = vld [vmem:[%s221 + $0x18] sm:$0xff]
      %v235 = vld [vmem:[%s221 + $0x20] sm:$0xff]
      %v236 = vld [vmem:[%s221 + $0x28] sm:$0xff]
      %v237 = vld [vmem:[%s221 + $0x30] sm:$0xff]
      %v238 = vld [vmem:[%s221 + $0x38] sm:$0xff]
      %v239 = vld [vmem:[%s221 + $0x40] sm:$0xff]
      %v240 = vld [vmem:[%s221 + $0x48] sm:$0xff]
      %v241 = vld [vmem:[%s221 + $0x50] sm:$0xff]
      %v242 = vld [vmem:[%s221 + $0x58] sm:$0xff]
      %v243 = vld [vmem:[%s221 + $0x60] sm:$0xff]
      %v244 = vld [vmem:[%s221 + $0x68] sm:$0xff]
      %v245 = vld [vmem:[%s221 + $0x70] sm:$0xff]
      %v246 = vld [vmem:[%s221 + $0x78] sm:$0xff]
      %v247 = vpack.c.bf16 %v232, %v231
      %v248 = vpack.c.bf16 %v234, %v233
      %v249 = vpack.c.bf16 %v236, %v235
      %v250 = vpack.c.bf16 %v238, %v237
      %v251 = vpack.c.bf16 %v240, %v239
      %v252 = vpack.c.bf16 %v242, %v241
      %v253 = vpack.c.bf16 %v244, %v243
      %v254 = vpack.c.bf16 %v246, %v245
      %v255 = vld [vmem:[%s1] sm:$0xff]
      %v256 = vld [vmem:[%s1 + $0x8] sm:$0xff]
      %v257 = vld [vmem:[%s1 + $0x10] sm:$0xff]
      %v258 = vld [vmem:[%s1 + $0x18] sm:$0xff]
      %v259 = vld [vmem:[%s1 + $0x20] sm:$0xff]
      %v260 = vld [vmem:[%s1 + $0x28] sm:$0xff]
      %v261 = vld [vmem:[%s1 + $0x30] sm:$0xff]
      %v262 = vld [vmem:[%s1 + $0x38] sm:$0xff]
      %v263 = vld [vmem:[%s2] sm:$0x3]
      %v265 = vlaneseq
      %v266 = vshrl.u32 %v265, 7
      %v267 = vsub.s32 0, %v266
      %v268 = vrot.slane %v263, %v267
      %v269 = vlaneseq
      %v270 = vshrl.u32 %v269, 7
      %v271 = vsub.s32 1, %v270
      %v272 = vrot.slane %v263, %v271
      %v283 = vunpack.c.l.b16 %v255
      %v284 = vunpack.c.h.b16 %v255
      %v285 = vunpack.c.l.b16 %v256
      %v286 = vunpack.c.h.b16 %v256
      %v287 = vunpack.c.l.b16 %v257
      %v288 = vunpack.c.h.b16 %v257
      %v289 = vunpack.c.l.b16 %v258
      %v290 = vunpack.c.h.b16 %v258
      %v291 = vunpack.c.l.b16 %v259
      %v292 = vunpack.c.h.b16 %v259
      %v293 = vunpack.c.l.b16 %v260
      %v294 = vunpack.c.h.b16 %v260
      %v295 = vunpack.c.l.b16 %v261
      %v296 = vunpack.c.h.b16 %v261
      %v297 = vunpack.c.l.b16 %v262
      %v298 = vunpack.c.h.b16 %v262
      %v299 = vpack.c.b16 %v285, %v283
      %v300 = vpack.c.b16 %v286, %v284
      %v301 = vpack.c.b16 %v289, %v287
      %v302 = vpack.c.b16 %v290, %v288
      %v303 = vpack.c.b16 %v293, %v291
      %v304 = vpack.c.b16 %v294, %v292
      %v305 = vpack.c.b16 %v297, %v295
      %v306 = vpack.c.b16 %v298, %v296
      %vm315 = vcmask 523264
      %v317 = vsel %vm315, %v247, 0
      %v320 = vsel %vm315, %v248, 0
      %v323 = vsel %vm315, %v249, 0
      %v326 = vsel %vm315, %v250, 0
      %v329 = vsel %vm315, %v251, 0
      %v332 = vsel %vm315, %v252, 0
      %v335 = vsel %vm315, %v253, 0
      %v338 = vsel %vm315, %v254, 0
      %340 = vmatprep.subr.bf16.mxu0 %v300
      %341 = vmatpush1.bf16.msra.mxu0 %v299
      %342 = vmatprep.subr.bf16.mxu0 %v302
      %343 = vmatpush1.bf16.msra.mxu0 %v301
      %344 = vmatprep.subr.bf16.mxu0 %v304
      %345 = vmatpush1.bf16.msra.mxu0 %v303
      %346 = vmatprep.subr.bf16.mxu0 %v306
      %347 = vmatpush1.bf16.msra.mxu0 %v305
      %348 = vmatprep.subr.bf16.mxu0 0
      %349 = vmatpush1.bf16.msra.mxu0 0
      %350 = vmatprep.subr.bf16.mxu0 0
      %351 = vmatpush1.bf16.msra.mxu0 0
      %352 = vmatprep.subr.bf16.mxu0 0
      %353 = vmatpush1.bf16.msra.mxu0 0
      %354 = vmatprep.subr.bf16.mxu0 0
      %355 = vmatpush1.bf16.msra.mxu0 0
      %356 = vmatprep.subr.bf16.mxu0 0
      %357 = vmatpush1.bf16.msra.mxu0 0
      %358 = vmatprep.subr.bf16.mxu0 0
      %359 = vmatpush1.bf16.msra.mxu0 0
      %360 = vmatprep.subr.bf16.mxu0 0
      %361 = vmatpush1.bf16.msra.mxu0 0
      %362 = vmatprep.subr.bf16.mxu0 0
      %363 = vmatpush1.bf16.msra.mxu0 0
      %364 = vmatprep.subr.bf16.mxu0 0
      %365 = vmatpush1.bf16.msra.mxu0 0
      %366 = vmatprep.subr.bf16.mxu0 0
      %367 = vmatpush1.bf16.msra.mxu0 0
      %368 = vmatprep.subr.bf16.mxu0 0
      %369 = vmatpush1.bf16.msra.mxu0 0
      %370 = vmatprep.subr.bf16.mxu0 0
      %371 = vmatpush1.bf16.msra.mxu0 0
      %372 = vmatprep.mubr.bf16.mxu0 0
      %373 = vmatmul.mubr.bf16.gmra.mrb[0].mxu0 %v317
      %v374 = vpop.f32.mrb[0].mxu0
      %v375 = vadd.f32 %v268, %v374
      %v376 = vpop.f32.mrb[0].mxu0
      %v377 = vadd.f32 %v272, %v376
      %v378 = vpop.f32.mrb[0].mxu0
      %v379 = vadd.f32 %v268, %v378
      %v380 = vpop.f32.mrb[0].mxu0
      %v381 = vadd.f32 %v272, %v380
      %382 = vmatprep.mubr.bf16.mxu0 0
      %383 = vmatmul.mubr.bf16.gmra.mrb[0].mxu0 %v320
      %v384 = vpop.f32.mrb[0].mxu0
      %v385 = vadd.f32 %v268, %v384
      %v386 = vpop.f32.mrb[0].mxu0
      %v387 = vadd.f32 %v272, %v386
      %v388 = vpop.f32.mrb[0].mxu0
      %v389 = vadd.f32 %v268, %v388
      %v390 = vpop.f32.mrb[0].mxu0
      %v391 = vadd.f32 %v272, %v390
      %392 = vmatprep.mubr.bf16.mxu0 0
      %393 = vmatmul.mubr.bf16.gmra.mrb[0].mxu0 %v323
      %v394 = vpop.f32.mrb[0].mxu0
      %v395 = vadd.f32 %v268, %v394
      %v396 = vpop.f32.mrb[0].mxu0
      %v397 = vadd.f32 %v272, %v396
      %v398 = vpop.f32.mrb[0].mxu0
      %v399 = vadd.f32 %v268, %v398
      %v400 = vpop.f32.mrb[0].mxu0
      %v401 = vadd.f32 %v272, %v400
      %402 = vmatprep.mubr.bf16.mxu0 0
      %403 = vmatmul.mubr.bf16.gmra.mrb[0].mxu0 %v326
      %v404 = vpop.f32.mrb[0].mxu0
      %v405 = vadd.f32 %v268, %v404
      %v406 = vpop.f32.mrb[0].mxu0
      %v407 = vadd.f32 %v272, %v406
      %v408 = vpop.f32.mrb[0].mxu0
      %v409 = vadd.f32 %v268, %v408
      %v410 = vpop.f32.mrb[0].mxu0
      %v411 = vadd.f32 %v272, %v410
      %412 = vmatprep.mubr.bf16.mxu0 0
      %413 = vmatmul.mubr.bf16.gmra.mrb[0].mxu0 %v329
      %v414 = vpop.f32.mrb[0].mxu0
      %v415 = vadd.f32 %v268, %v414
      %v416 = vpop.f32.mrb[0].mxu0
      %v417 = vadd.f32 %v272, %v416
      %v418 = vpop.f32.mrb[0].mxu0
      %v419 = vadd.f32 %v268, %v418
      %v420 = vpop.f32.mrb[0].mxu0
      %v421 = vadd.f32 %v272, %v420
      %422 = vmatprep.mubr.bf16.mxu0 0
      %423 = vmatmul.mubr.bf16.gmra.mrb[0].mxu0 %v332
      %v424 = vpop.f32.mrb[0].mxu0
      %v425 = vadd.f32 %v268, %v424
      %v426 = vpop.f32.mrb[0].mxu0
      %v427 = vadd.f32 %v272, %v426
      %v428 = vpop.f32.mrb[0].mxu0
      %v429 = vadd.f32 %v268, %v428
      %v430 = vpop.f32.mrb[0].mxu0
      %v431 = vadd.f32 %v272, %v430
      %432 = vmatprep.mubr.bf16.mxu0 0
      %433 = vmatmul.mubr.bf16.gmra.mrb[0].mxu0 %v335
      %v434 = vpop.f32.mrb[0].mxu0
      %v435 = vadd.f32 %v268, %v434
      %v436 = vpop.f32.mrb[0].mxu0
      %v437 = vadd.f32 %v272, %v436
      %v438 = vpop.f32.mrb[0].mxu0
      %v439 = vadd.f32 %v268, %v438
      %v440 = vpop.f32.mrb[0].mxu0
      %v441 = vadd.f32 %v272, %v440
      %442 = vmatprep.mubr.bf16.mxu0 0
      %443 = vmatmul.mubr.bf16.gmra.mrb[0].mxu0 %v338
      %v444 = vpop.f32.mrb[0].mxu0
      %v445 = vadd.f32 %v268, %v444
      %v446 = vpop.f32.mrb[0].mxu0
      %v447 = vadd.f32 %v272, %v446
      %v448 = vpop.f32.mrb[0].mxu0
      %v449 = vadd.f32 %v268, %v448
      %v450 = vpop.f32.mrb[0].mxu0
      %v451 = vadd.f32 %v272, %v450
      %452 = vdwg.mxu0
      %v453 = vmul.f32 %v375, 0.1
      %v454 = vmul.f32 %v377, 0.1
      %v455 = vmul.f32 %v379, 0.1
      %v456 = vmul.f32 %v381, 0.1
      %v457 = vmul.f32 %v385, 0.1
      %v458 = vmul.f32 %v387, 0.1
      %v459 = vmul.f32 %v389, 0.1
      %v460 = vmul.f32 %v391, 0.1
      %v461 = vmul.f32 %v395, 0.1
      %v462 = vmul.f32 %v397, 0.1
      %v463 = vmul.f32 %v399, 0.1
      %v464 = vmul.f32 %v401, 0.1
      %v465 = vmul.f32 %v405, 0.1
      %v466 = vmul.f32 %v407, 0.1
      %v467 = vmul.f32 %v409, 0.1
      %v468 = vmul.f32 %v411, 0.1
      %v469 = vmul.f32 %v415, 0.1
      %v470 = vmul.f32 %v417, 0.1
      %v471 = vmul.f32 %v419, 0.1
      %v472 = vmul.f32 %v421, 0.1
      %v473 = vmul.f32 %v425, 0.1
      %v474 = vmul.f32 %v427, 0.1
      %v475 = vmul.f32 %v429, 0.1
      %v476 = vmul.f32 %v431, 0.1
      %v477 = vmul.f32 %v435, 0.1
      %v478 = vmul.f32 %v437, 0.1
      %v479 = vmul.f32 %v439, 0.1
      %v480 = vmul.f32 %v441, 0.1
      %v481 = vmul.f32 %v445, 0.1
      %v482 = vmul.f32 %v447, 0.1
      %v483 = vmul.f32 %v449, 0.1
      %v484 = vmul.f32 %v451, 0.1
      %v485 = vmax.f32 %v375, %v453
      %v486 = vmax.f32 %v377, %v454
      %v487 = vmax.f32 %v379, %v455
      %v488 = vmax.f32 %v381, %v456
      %v489 = vmax.f32 %v385, %v457
      %v490 = vmax.f32 %v387, %v458
      %v491 = vmax.f32 %v389, %v459
      %v492 = vmax.f32 %v391, %v460
      %v493 = vmax.f32 %v395, %v461
      %v494 = vmax.f32 %v397, %v462
      %v495 = vmax.f32 %v399, %v463
      %v496 = vmax.f32 %v401, %v464
      %v497 = vmax.f32 %v405, %v465
      %v498 = vmax.f32 %v407, %v466
      %v499 = vmax.f32 %v409, %v467
      %v500 = vmax.f32 %v411, %v468
      %v501 = vmax.f32 %v415, %v469
      %v502 = vmax.f32 %v417, %v470
      %v503 = vmax.f32 %v419, %v471
      %v504 = vmax.f32 %v421, %v472
      %v505 = vmax.f32 %v425, %v473
      %v506 = vmax.f32 %v427, %v474
      %v507 = vmax.f32 %v429, %v475
      %v508 = vmax.f32 %v431, %v476
      %v509 = vmax.f32 %v435, %v477
      %v510 = vmax.f32 %v437, %v478
      %v511 = vmax.f32 %v439, %v479
      %v512 = vmax.f32 %v441, %v480
      %v513 = vmax.f32 %v445, %v481
      %v514 = vmax.f32 %v447, %v482
      %v515 = vmax.f32 %v449, %v483
      %v516 = vmax.f32 %v451, %v484
      %v517 = vpack.c.bf16 %v487, %v485
      %v518 = vpack.c.bf16 %v488, %v486
      %v519 = vpack.c.bf16 %v491, %v489
      %v520 = vpack.c.bf16 %v492, %v490
      %v521 = vpack.c.bf16 %v495, %v493
      %v522 = vpack.c.bf16 %v496, %v494
      %v523 = vpack.c.bf16 %v499, %v497
      %v524 = vpack.c.bf16 %v500, %v498
      %v525 = vpack.c.bf16 %v503, %v501
      %v526 = vpack.c.bf16 %v504, %v502
      %v527 = vpack.c.bf16 %v507, %v505
      %v528 = vpack.c.bf16 %v508, %v506
      %v529 = vpack.c.bf16 %v511, %v509
      %v530 = vpack.c.bf16 %v512, %v510
      %v531 = vpack.c.bf16 %v515, %v513
      %v532 = vpack.c.bf16 %v516, %v514
      %v533 = vld [vmem:[%s3] sm:$0xff]
      %v534 = vld [vmem:[%s3 + $0x8] sm:$0xff]
      %v535 = vld [vmem:[%s3 + $0x10] sm:$0xff]
      %v536 = vld [vmem:[%s3 + $0x18] sm:$0xf]
      %v537 = vld [vmem:[%s3 + $0x1c] sm:$0xff]
      %v538 = vld [vmem:[%s3 + $0x24] sm:$0xff]
      %v539 = vld [vmem:[%s3 + $0x2c] sm:$0xff]
      %v540 = vld [vmem:[%s3 + $0x34] sm:$0xf]
      %v541 = vld [vmem:[%s3 + $0x38] sm:$0xff]
      %v542 = vld [vmem:[%s3 + $0x40] sm:$0xff]
      %v543 = vld [vmem:[%s3 + $0x48] sm:$0xff]
      %v544 = vld [vmem:[%s3 + $0x50] sm:$0xf]
      %v545 = vld [vmem:[%s3 + $0x54] sm:$0xff]
      %v546 = vld [vmem:[%s3 + $0x5c] sm:$0xff]
      %v547 = vld [vmem:[%s3 + $0x64] sm:$0xff]
      %v548 = vld [vmem:[%s3 + $0x6c] sm:$0xf]
      %v549 = vld [vmem:[%s3 + $0x70] sm:$0xff]
      %v550 = vld [vmem:[%s3 + $0x78] sm:$0xff]
      %v551 = vld [vmem:[%s3 + $0x80] sm:$0xff]
      %v552 = vld [vmem:[%s3 + $0x88] sm:$0xf]
      %v553 = vld [vmem:[%s3 + $0x8c] sm:$0xff]
      %v554 = vld [vmem:[%s3 + $0x94] sm:$0xff]
      %v555 = vld [vmem:[%s3 + $0x9c] sm:$0xff]
      %v556 = vld [vmem:[%s3 + $0xa4] sm:$0xf]
      %v557 = vld [vmem:[%s3 + $0xa8] sm:$0xff]
      %v558 = vld [vmem:[%s3 + $0xb0] sm:$0xff]
      %v559 = vld [vmem:[%s3 + $0xb8] sm:$0xff]
      %v560 = vld [vmem:[%s3 + $0xc0] sm:$0xf]
      %v561 = vld [vmem:[%s3 + $0xc4] sm:$0xff]
      %v562 = vld [vmem:[%s3 + $0xcc] sm:$0xff]
      %v563 = vld [vmem:[%s3 + $0xd4] sm:$0xff]
      %v564 = vld [vmem:[%s3 + $0xdc] sm:$0xf]
      %v565 = vld [vmem:[%s3 + $0xe0] sm:$0xff]
      %v566 = vld [vmem:[%s3 + $0xe8] sm:$0xff]
      %v567 = vld [vmem:[%s3 + $0xf0] sm:$0xff]
      %v568 = vld [vmem:[%s3 + $0xf8] sm:$0xf]
      %v569 = vld [vmem:[%s3 + $0xfc] sm:$0xff]
      %v570 = vld [vmem:[%s3 + $0x104] sm:$0xff]
      %v571 = vld [vmem:[%s3 + $0x10c] sm:$0xff]
      %v572 = vld [vmem:[%s3 + $0x114] sm:$0xf]
      %v573 = vld [vmem:[%s3 + $0x118] sm:$0xff]
      %v574 = vld [vmem:[%s3 + $0x120] sm:$0xff]
      %v575 = vld [vmem:[%s3 + $0x128] sm:$0xff]
      %v576 = vld [vmem:[%s3 + $0x130] sm:$0xf]
      %v577 = vld [vmem:[%s3 + $0x134] sm:$0xff]
      %v578 = vld [vmem:[%s3 + $0x13c] sm:$0xff]
      %v579 = vld [vmem:[%s3 + $0x144] sm:$0xff]
      %v580 = vld [vmem:[%s3 + $0x14c] sm:$0xf]
      %v581 = vld [vmem:[%s3 + $0x150] sm:$0xff]
      %v582 = vld [vmem:[%s3 + $0x158] sm:$0xff]
      %v583 = vld [vmem:[%s3 + $0x160] sm:$0xff]
      %v584 = vld [vmem:[%s3 + $0x168] sm:$0xf]
      %v585 = vld [vmem:[%s3 + $0x16c] sm:$0xff]
      %v586 = vld [vmem:[%s3 + $0x174] sm:$0xff]
      %v587 = vld [vmem:[%s3 + $0x17c] sm:$0xff]
      %v588 = vld [vmem:[%s3 + $0x184] sm:$0xf]
      %v589 = vld [vmem:[%s3 + $0x188] sm:$0xff]
      %v590 = vld [vmem:[%s3 + $0x190] sm:$0xff]
      %v591 = vld [vmem:[%s3 + $0x198] sm:$0xff]
      %v592 = vld [vmem:[%s3 + $0x1a0] sm:$0xf]
      %v593 = vld [vmem:[%s3 + $0x1a4] sm:$0xff]
      %v594 = vld [vmem:[%s3 + $0x1ac] sm:$0xff]
      %v595 = vld [vmem:[%s3 + $0x1b4] sm:$0xff]
      %v596 = vld [vmem:[%s3 + $0x1bc] sm:$0xf]
      %v597 = vld [vmem:[%s3 + $0x1c0] sm:$0xff]
      %v598 = vld [vmem:[%s3 + $0x1c8] sm:$0xff]
      %v599 = vld [vmem:[%s3 + $0x1d0] sm:$0xff]
      %v600 = vld [vmem:[%s3 + $0x1d8] sm:$0xf]
      %v601 = vld [vmem:[%s3 + $0x1dc] sm:$0xff]
      %v602 = vld [vmem:[%s3 + $0x1e4] sm:$0xff]
      %v603 = vld [vmem:[%s3 + $0x1ec] sm:$0xff]
      %v604 = vld [vmem:[%s3 + $0x1f4] sm:$0xf]
      %v605 = vld [vmem:[%s3 + $0x1f8] sm:$0xff]
      %v606 = vld [vmem:[%s3 + $0x200] sm:$0xff]
      %v607 = vld [vmem:[%s3 + $0x208] sm:$0xff]
      %v608 = vld [vmem:[%s3 + $0x210] sm:$0xf]
      %v609 = vld [vmem:[%s3 + $0x214] sm:$0xff]
      %v610 = vld [vmem:[%s3 + $0x21c] sm:$0xff]
      %v611 = vld [vmem:[%s3 + $0x224] sm:$0xff]
      %v612 = vld [vmem:[%s3 + $0x22c] sm:$0xf]
      %v613 = vld [vmem:[%s3 + $0x230] sm:$0xff]
      %v614 = vld [vmem:[%s3 + $0x238] sm:$0xff]
      %v615 = vld [vmem:[%s3 + $0x240] sm:$0xff]
      %v616 = vld [vmem:[%s3 + $0x248] sm:$0xf]
      %v617 = vld [vmem:[%s3 + $0x24c] sm:$0xff]
      %v618 = vld [vmem:[%s3 + $0x254] sm:$0xff]
      %v619 = vld [vmem:[%s3 + $0x25c] sm:$0xff]
      %v620 = vld [vmem:[%s3 + $0x264] sm:$0xf]
      %v621 = vld [vmem:[%s3 + $0x268] sm:$0xff]
      %v622 = vld [vmem:[%s3 + $0x270] sm:$0xff]
      %v623 = vld [vmem:[%s3 + $0x278] sm:$0xff]
      %v624 = vld [vmem:[%s3 + $0x280] sm:$0xf]
      %v625 = vld [vmem:[%s3 + $0x284] sm:$0xff]
      %v626 = vld [vmem:[%s3 + $0x28c] sm:$0xff]
      %v627 = vld [vmem:[%s3 + $0x294] sm:$0xff]
      %v628 = vld [vmem:[%s3 + $0x29c] sm:$0xf]
      %v629 = vld [vmem:[%s3 + $0x2a0] sm:$0xff]
      %v630 = vld [vmem:[%s3 + $0x2a8] sm:$0xff]
      %v631 = vld [vmem:[%s3 + $0x2b0] sm:$0xff]
      %v632 = vld [vmem:[%s3 + $0x2b8] sm:$0xf]
      %v633 = vld [vmem:[%s3 + $0x2bc] sm:$0xff]
      %v634 = vld [vmem:[%s3 + $0x2c4] sm:$0xff]
      %v635 = vld [vmem:[%s3 + $0x2cc] sm:$0xff]
      %v636 = vld [vmem:[%s3 + $0x2d4] sm:$0xf]
      %v637 = vld [vmem:[%s3 + $0x2d8] sm:$0xff]
      %v638 = vld [vmem:[%s3 + $0x2e0] sm:$0xff]
      %v639 = vld [vmem:[%s3 + $0x2e8] sm:$0xff]
      %v640 = vld [vmem:[%s3 + $0x2f0] sm:$0xf]
      %v641 = vld [vmem:[%s3 + $0x2f4] sm:$0xff]
      %v642 = vld [vmem:[%s3 + $0x2fc] sm:$0xff]
      %v643 = vld [vmem:[%s3 + $0x304] sm:$0xff]
      %v644 = vld [vmem:[%s3 + $0x30c] sm:$0xf]
      %v645 = vld [vmem:[%s3 + $0x310] sm:$0xff]
      %v646 = vld [vmem:[%s3 + $0x318] sm:$0xff]
      %v647 = vld [vmem:[%s3 + $0x320] sm:$0xff]
      %v648 = vld [vmem:[%s3 + $0x328] sm:$0xf]
      %v649 = vld [vmem:[%s3 + $0x32c] sm:$0xff]
      %v650 = vld [vmem:[%s3 + $0x334] sm:$0xff]
      %v651 = vld [vmem:[%s3 + $0x33c] sm:$0xff]
      %v652 = vld [vmem:[%s3 + $0x344] sm:$0xf]
      %v653 = vld [vmem:[%s3 + $0x348] sm:$0xff]
      %v654 = vld [vmem:[%s3 + $0x350] sm:$0xff]
      %v655 = vld [vmem:[%s3 + $0x358] sm:$0xff]
      %v656 = vld [vmem:[%s3 + $0x360] sm:$0xf]
      %v657 = vld [vmem:[%s3 + $0x364] sm:$0xff]
      %v658 = vld [vmem:[%s3 + $0x36c] sm:$0xff]
      %v659 = vld [vmem:[%s3 + $0x374] sm:$0xff]
      %v660 = vld [vmem:[%s3 + $0x37c] sm:$0xf]
      %v661 = vld [vmem:[%s4] sm:$0x7f]
      %v663 = vlaneseq
      %v664 = vshrl.u32 %v663, 7
      %v665 = vsub.s32 0, %v664
      %v666 = vrot.slane %v661, %v665
      %v667 = vlaneseq
      %v668 = vshrl.u32 %v667, 7
      %v669 = vsub.s32 1, %v668
      %v670 = vrot.slane %v661, %v669
      %v671 = vlaneseq
      %v672 = vshrl.u32 %v671, 7
      %v673 = vsub.s32 2, %v672
      %v674 = vrot.slane %v661, %v673
      %v675 = vlaneseq
      %v676 = vshrl.u32 %v675, 7
      %v677 = vsub.s32 3, %v676
      %v678 = vrot.slane %v661, %v677
      %v679 = vlaneseq
      %v680 = vshrl.u32 %v679, 7
      %v681 = vsub.s32 4, %v680
      %v682 = vrot.slane %v661, %v681
      %v683 = vlaneseq
      %v684 = vshrl.u32 %v683, 7
      %v685 = vsub.s32 5, %v684
      %v686 = vrot.slane %v661, %v685
      %v687 = vlaneseq
      %v688 = vshrl.u32 %v687, 7
      %v689 = vsub.s32 6, %v688
      %v690 = vrot.slane %v661, %v689
      %v826 = vunpack.c.l.b16 %v533
      %v827 = vunpack.c.h.b16 %v533
      %v828 = vunpack.c.l.b16 %v534
      %v829 = vunpack.c.h.b16 %v534
      %v830 = vunpack.c.l.b16 %v535
      %v831 = vunpack.c.h.b16 %v535
      %v832 = vunpack.c.l.b16 %v536
      %v833 = vunpack.c.l.b16 %v537
      %v834 = vunpack.c.h.b16 %v537
      %v835 = vunpack.c.l.b16 %v538
      %v836 = vunpack.c.h.b16 %v538
      %v837 = vunpack.c.l.b16 %v539
      %v838 = vunpack.c.h.b16 %v539
      %v839 = vunpack.c.l.b16 %v540
      %v840 = vunpack.c.l.b16 %v541
      %v841 = vunpack.c.h.b16 %v541
      %v842 = vunpack.c.l.b16 %v542
      %v843 = vunpack.c.h.b16 %v542
      %v844 = vunpack.c.l.b16 %v543
      %v845 = vunpack.c.h.b16 %v543
      %v846 = vunpack.c.l.b16 %v544
      %v847 = vunpack.c.l.b16 %v545
      %v848 = vunpack.c.h.b16 %v545
      %v849 = vunpack.c.l.b16 %v546
      %v850 = vunpack.c.h.b16 %v546
      %v851 = vunpack.c.l.b16 %v547
      %v852 = vunpack.c.h.b16 %v547
      %v853 = vunpack.c.l.b16 %v548
      %v854 = vunpack.c.l.b16 %v549
      %v855 = vunpack.c.h.b16 %v549
      %v856 = vunpack.c.l.b16 %v550
      %v857 = vunpack.c.h.b16 %v550
      %v858 = vunpack.c.l.b16 %v551
      %v859 = vunpack.c.h.b16 %v551
      %v860 = vunpack.c.l.b16 %v552
      %v861 = vunpack.c.l.b16 %v553
      %v862 = vunpack.c.h.b16 %v553
      %v863 = vunpack.c.l.b16 %v554
      %v864 = vunpack.c.h.b16 %v554
      %v865 = vunpack.c.l.b16 %v555
      %v866 = vunpack.c.h.b16 %v555
      %v867 = vunpack.c.l.b16 %v556
      %v868 = vunpack.c.l.b16 %v557
      %v869 = vunpack.c.h.b16 %v557
      %v870 = vunpack.c.l.b16 %v558
      %v871 = vunpack.c.h.b16 %v558
      %v872 = vunpack.c.l.b16 %v559
      %v873 = vunpack.c.h.b16 %v559
      %v874 = vunpack.c.l.b16 %v560
      %v875 = vunpack.c.l.b16 %v561
      %v876 = vunpack.c.h.b16 %v561
      %v877 = vunpack.c.l.b16 %v562
      %v878 = vunpack.c.h.b16 %v562
      %v879 = vunpack.c.l.b16 %v563
      %v880 = vunpack.c.h.b16 %v563
      %v881 = vunpack.c.l.b16 %v564
      %v882 = vunpack.c.l.b16 %v565
      %v883 = vunpack.c.h.b16 %v565
      %v884 = vunpack.c.l.b16 %v566
      %v885 = vunpack.c.h.b16 %v566
      %v886 = vunpack.c.l.b16 %v567
      %v887 = vunpack.c.h.b16 %v567
      %v888 = vunpack.c.l.b16 %v568
      %v889 = vunpack.c.l.b16 %v569
      %v890 = vunpack.c.h.b16 %v569
      %v891 = vunpack.c.l.b16 %v570
      %v892 = vunpack.c.h.b16 %v570
      %v893 = vunpack.c.l.b16 %v571
      %v894 = vunpack.c.h.b16 %v571
      %v895 = vunpack.c.l.b16 %v572
      %v896 = vunpack.c.l.b16 %v573
      %v897 = vunpack.c.h.b16 %v573
      %v898 = vunpack.c.l.b16 %v574
      %v899 = vunpack.c.h.b16 %v574
      %v900 = vunpack.c.l.b16 %v575
      %v901 = vunpack.c.h.b16 %v575
      %v902 = vunpack.c.l.b16 %v576
      %v903 = vunpack.c.l.b16 %v577
      %v904 = vunpack.c.h.b16 %v577
      %v905 = vunpack.c.l.b16 %v578
      %v906 = vunpack.c.h.b16 %v578
      %v907 = vunpack.c.l.b16 %v579
      %v908 = vunpack.c.h.b16 %v579
      %v909 = vunpack.c.l.b16 %v580
      %v910 = vunpack.c.l.b16 %v581
      %v911 = vunpack.c.h.b16 %v581
      %v912 = vunpack.c.l.b16 %v582
      %v913 = vunpack.c.h.b16 %v582
      %v914 = vunpack.c.l.b16 %v583
      %v915 = vunpack.c.h.b16 %v583
      %v916 = vunpack.c.l.b16 %v584
      %v917 = vunpack.c.l.b16 %v585
      %v918 = vunpack.c.h.b16 %v585
      %v919 = vunpack.c.l.b16 %v586
      %v920 = vunpack.c.h.b16 %v586
      %v921 = vunpack.c.l.b16 %v587
      %v922 = vunpack.c.h.b16 %v587
      %v923 = vunpack.c.l.b16 %v588
      %v924 = vunpack.c.l.b16 %v589
      %v925 = vunpack.c.h.b16 %v589
      %v926 = vunpack.c.l.b16 %v590
      %v927 = vunpack.c.h.b16 %v590
      %v928 = vunpack.c.l.b16 %v591
      %v929 = vunpack.c.h.b16 %v591
      %v930 = vunpack.c.l.b16 %v592
      %v931 = vunpack.c.l.b16 %v593
      %v932 = vunpack.c.h.b16 %v593
      %v933 = vunpack.c.l.b16 %v594
      %v934 = vunpack.c.h.b16 %v594
      %v935 = vunpack.c.l.b16 %v595
      %v936 = vunpack.c.h.b16 %v595
      %v937 = vunpack.c.l.b16 %v596
      %v938 = vunpack.c.l.b16 %v597
      %v939 = vunpack.c.h.b16 %v597
      %v940 = vunpack.c.l.b16 %v598
      %v941 = vunpack.c.h.b16 %v598
      %v942 = vunpack.c.l.b16 %v599
      %v943 = vunpack.c.h.b16 %v599
      %v944 = vunpack.c.l.b16 %v600
      %v945 = vunpack.c.l.b16 %v601
      %v946 = vunpack.c.h.b16 %v601
      %v947 = vunpack.c.l.b16 %v602
      %v948 = vunpack.c.h.b16 %v602
      %v949 = vunpack.c.l.b16 %v603
      %v950 = vunpack.c.h.b16 %v603
      %v951 = vunpack.c.l.b16 %v604
      %v952 = vunpack.c.l.b16 %v605
      %v953 = vunpack.c.h.b16 %v605
      %v954 = vunpack.c.l.b16 %v606
      %v955 = vunpack.c.h.b16 %v606
      %v956 = vunpack.c.l.b16 %v607
      %v957 = vunpack.c.h.b16 %v607
      %v958 = vunpack.c.l.b16 %v608
      %v959 = vunpack.c.l.b16 %v609
      %v960 = vunpack.c.h.b16 %v609
      %v961 = vunpack.c.l.b16 %v610
      %v962 = vunpack.c.h.b16 %v610
      %v963 = vunpack.c.l.b16 %v611
      %v964 = vunpack.c.h.b16 %v611
      %v965 = vunpack.c.l.b16 %v612
      %v966 = vunpack.c.l.b16 %v613
      %v967 = vunpack.c.h.b16 %v613
      %v968 = vunpack.c.l.b16 %v614
      %v969 = vunpack.c.h.b16 %v614
      %v970 = vunpack.c.l.b16 %v615
      %v971 = vunpack.c.h.b16 %v615
      %v972 = vunpack.c.l.b16 %v616
      %v973 = vunpack.c.l.b16 %v617
      %v974 = vunpack.c.h.b16 %v617
      %v975 = vunpack.c.l.b16 %v618
      %v976 = vunpack.c.h.b16 %v618
      %v977 = vunpack.c.l.b16 %v619
      %v978 = vunpack.c.h.b16 %v619
      %v979 = vunpack.c.l.b16 %v620
      %v980 = vunpack.c.l.b16 %v621
      %v981 = vunpack.c.h.b16 %v621
      %v982 = vunpack.c.l.b16 %v622
      %v983 = vunpack.c.h.b16 %v622
      %v984 = vunpack.c.l.b16 %v623
      %v985 = vunpack.c.h.b16 %v623
      %v986 = vunpack.c.l.b16 %v624
      %v987 = vunpack.c.l.b16 %v625
      %v988 = vunpack.c.h.b16 %v625
      %v989 = vunpack.c.l.b16 %v626
      %v990 = vunpack.c.h.b16 %v626
      %v991 = vunpack.c.l.b16 %v627
      %v992 = vunpack.c.h.b16 %v627
      %v993 = vunpack.c.l.b16 %v628
      %v994 = vunpack.c.l.b16 %v629
      %v995 = vunpack.c.h.b16 %v629
      %v996 = vunpack.c.l.b16 %v630
      %v997 = vunpack.c.h.b16 %v630
      %v998 = vunpack.c.l.b16 %v631
      %v999 = vunpack.c.h.b16 %v631
      %v1000 = vunpack.c.l.b16 %v632
      %v1001 = vunpack.c.l.b16 %v633
      %v1002 = vunpack.c.h.b16 %v633
      %v1003 = vunpack.c.l.b16 %v634
      %v1004 = vunpack.c.h.b16 %v634
      %v1005 = vunpack.c.l.b16 %v635
      %v1006 = vunpack.c.h.b16 %v635
      %v1007 = vunpack.c.l.b16 %v636
      %v1008 = vunpack.c.l.b16 %v637
      %v1009 = vunpack.c.h.b16 %v637
      %v1010 = vunpack.c.l.b16 %v638
      %v1011 = vunpack.c.h.b16 %v638
      %v1012 = vunpack.c.l.b16 %v639
      %v1013 = vunpack.c.h.b16 %v639
      %v1014 = vunpack.c.l.b16 %v640
      %v1015 = vunpack.c.l.b16 %v641
      %v1016 = vunpack.c.h.b16 %v641
      %v1017 = vunpack.c.l.b16 %v642
      %v1018 = vunpack.c.h.b16 %v642
      %v1019 = vunpack.c.l.b16 %v643
      %v1020 = vunpack.c.h.b16 %v643
      %v1021 = vunpack.c.l.b16 %v644
      %v1022 = vunpack.c.l.b16 %v645
      %v1023 = vunpack.c.h.b16 %v645
      %v1024 = vunpack.c.l.b16 %v646
      %v1025 = vunpack.c.h.b16 %v646
      %v1026 = vunpack.c.l.b16 %v647
      %v1027 = vunpack.c.h.b16 %v647
      %v1028 = vunpack.c.l.b16 %v648
      %v1029 = vunpack.c.l.b16 %v649
      %v1030 = vunpack.c.h.b16 %v649
      %v1031 = vunpack.c.l.b16 %v650
      %v1032 = vunpack.c.h.b16 %v650
      %v1033 = vunpack.c.l.b16 %v651
      %v1034 = vunpack.c.h.b16 %v651
      %v1035 = vunpack.c.l.b16 %v652
      %v1036 = vunpack.c.l.b16 %v653
      %v1037 = vunpack.c.h.b16 %v653
      %v1038 = vunpack.c.l.b16 %v654
      %v1039 = vunpack.c.h.b16 %v654
      %v1040 = vunpack.c.l.b16 %v655
      %v1041 = vunpack.c.h.b16 %v655
      %v1042 = vunpack.c.l.b16 %v656
      %v1043 = vunpack.c.l.b16 %v657
      %v1044 = vunpack.c.h.b16 %v657
      %v1045 = vunpack.c.l.b16 %v658
      %v1046 = vunpack.c.h.b16 %v658
      %v1047 = vunpack.c.l.b16 %v659
      %v1048 = vunpack.c.h.b16 %v659
      %v1049 = vunpack.c.l.b16 %v660
      %v1050 = vpack.c.b16 %v833, %v826
      %v1051 = vpack.c.b16 %v834, %v827
      %v1052 = vpack.c.b16 %v835, %v828
      %v1053 = vpack.c.b16 %v836, %v829
      %v1054 = vpack.c.b16 %v837, %v830
      %v1055 = vpack.c.b16 %v838, %v831
      %v1056 = vpack.c.b16 %v839, %v832
      %v1057 = vpack.c.b16 %v847, %v840
      %v1058 = vpack.c.b16 %v848, %v841
      %v1059 = vpack.c.b16 %v849, %v842
      %v1060 = vpack.c.b16 %v850, %v843
      %v1061 = vpack.c.b16 %v851, %v844
      %v1062 = vpack.c.b16 %v852, %v845
      %v1063 = vpack.c.b16 %v853, %v846
      %v1064 = vpack.c.b16 %v861, %v854
      %v1065 = vpack.c.b16 %v862, %v855
      %v1066 = vpack.c.b16 %v863, %v856
      %v1067 = vpack.c.b16 %v864, %v857
      %v1068 = vpack.c.b16 %v865, %v858
      %v1069 = vpack.c.b16 %v866, %v859
      %v1070 = vpack.c.b16 %v867, %v860
      %v1071 = vpack.c.b16 %v875, %v868
      %v1072 = vpack.c.b16 %v876, %v869
      %v1073 = vpack.c.b16 %v877, %v870
      %v1074 = vpack.c.b16 %v878, %v871
      %v1075 = vpack.c.b16 %v879, %v872
      %v1076 = vpack.c.b16 %v880, %v873
      %v1077 = vpack.c.b16 %v881, %v874
      %v1078 = vpack.c.b16 %v889, %v882
      %v1079 = vpack.c.b16 %v890, %v883
      %v1080 = vpack.c.b16 %v891, %v884
      %v1081 = vpack.c.b16 %v892, %v885
      %v1082 = vpack.c.b16 %v893, %v886
      %v1083 = vpack.c.b16 %v894, %v887
      %v1084 = vpack.c.b16 %v895, %v888
      %v1085 = vpack.c.b16 %v903, %v896
      %v1086 = vpack.c.b16 %v904, %v897
      %v1087 = vpack.c.b16 %v905, %v898
      %v1088 = vpack.c.b16 %v906, %v899
      %v1089 = vpack.c.b16 %v907, %v900
      %v1090 = vpack.c.b16 %v908, %v901
      %v1091 = vpack.c.b16 %v909, %v902
      %v1092 = vpack.c.b16 %v917, %v910
      %v1093 = vpack.c.b16 %v918, %v911
      %v1094 = vpack.c.b16 %v919, %v912
      %v1095 = vpack.c.b16 %v920, %v913
      %v1096 = vpack.c.b16 %v921, %v914
      %v1097 = vpack.c.b16 %v922, %v915
      %v1098 = vpack.c.b16 %v923, %v916
      %v1099 = vpack.c.b16 %v931, %v924
      %v1100 = vpack.c.b16 %v932, %v925
      %v1101 = vpack.c.b16 %v933, %v926
      %v1102 = vpack.c.b16 %v934, %v927
      %v1103 = vpack.c.b16 %v935, %v928
      %v1104 = vpack.c.b16 %v936, %v929
      %v1105 = vpack.c.b16 %v937, %v930
      %v1106 = vpack.c.b16 %v945, %v938
      %v1107 = vpack.c.b16 %v946, %v939
      %v1108 = vpack.c.b16 %v947, %v940
      %v1109 = vpack.c.b16 %v948, %v941
      %v1110 = vpack.c.b16 %v949, %v942
      %v1111 = vpack.c.b16 %v950, %v943
      %v1112 = vpack.c.b16 %v951, %v944
      %v1113 = vpack.c.b16 %v959, %v952
      %v1114 = vpack.c.b16 %v960, %v953
      %v1115 = vpack.c.b16 %v961, %v954
      %v1116 = vpack.c.b16 %v962, %v955
      %v1117 = vpack.c.b16 %v963, %v956
      %v1118 = vpack.c.b16 %v964, %v957
      %v1119 = vpack.c.b16 %v965, %v958
      %v1120 = vpack.c.b16 %v973, %v966
      %v1121 = vpack.c.b16 %v974, %v967
      %v1122 = vpack.c.b16 %v975, %v968
      %v1123 = vpack.c.b16 %v976, %v969
      %v1124 = vpack.c.b16 %v977, %v970
      %v1125 = vpack.c.b16 %v978, %v971
      %v1126 = vpack.c.b16 %v979, %v972
      %v1127 = vpack.c.b16 %v987, %v980
      %v1128 = vpack.c.b16 %v988, %v981
      %v1129 = vpack.c.b16 %v989, %v982
      %v1130 = vpack.c.b16 %v990, %v983
      %v1131 = vpack.c.b16 %v991, %v984
      %v1132 = vpack.c.b16 %v992, %v985
      %v1133 = vpack.c.b16 %v993, %v986
      %v1134 = vpack.c.b16 %v1001, %v994
      %v1135 = vpack.c.b16 %v1002, %v995
      %v1136 = vpack.c.b16 %v1003, %v996
      %v1137 = vpack.c.b16 %v1004, %v997
      %v1138 = vpack.c.b16 %v1005, %v998
      %v1139 = vpack.c.b16 %v1006, %v999
      %v1140 = vpack.c.b16 %v1007, %v1000
      %v1141 = vpack.c.b16 %v1015, %v1008
      %v1142 = vpack.c.b16 %v1016, %v1009
      %v1143 = vpack.c.b16 %v1017, %v1010
      %v1144 = vpack.c.b16 %v1018, %v1011
      %v1145 = vpack.c.b16 %v1019, %v1012
      %v1146 = vpack.c.b16 %v1020, %v1013
      %v1147 = vpack.c.b16 %v1021, %v1014
      %v1148 = vpack.c.b16 %v1029, %v1022
      %v1149 = vpack.c.b16 %v1030, %v1023
      %v1150 = vpack.c.b16 %v1031, %v1024
      %v1151 = vpack.c.b16 %v1032, %v1025
      %v1152 = vpack.c.b16 %v1033, %v1026
      %v1153 = vpack.c.b16 %v1034, %v1027
      %v1154 = vpack.c.b16 %v1035, %v1028
      %v1155 = vpack.c.b16 %v1043, %v1036
      %v1156 = vpack.c.b16 %v1044, %v1037
      %v1157 = vpack.c.b16 %v1045, %v1038
      %v1158 = vpack.c.b16 %v1046, %v1039
      %v1159 = vpack.c.b16 %v1047, %v1040
      %v1160 = vpack.c.b16 %v1048, %v1041
      %v1161 = vpack.c.b16 %v1049, %v1042
      %1274 = vmatprep.subr.bf16.mxu0 %v1051
      %1275 = vmatpush1.bf16.msra.mxu0 %v1050
      %1276 = vmatprep.subr.bf16.mxu0 %v1058
      %1277 = vmatpush1.bf16.msra.mxu0 %v1057
      %1278 = vmatprep.subr.bf16.mxu0 %v1065
      %1279 = vmatpush1.bf16.msra.mxu0 %v1064
      %1280 = vmatprep.subr.bf16.mxu0 %v1072
      %1281 = vmatpush1.bf16.msra.mxu0 %v1071
      %1282 = vmatprep.subr.bf16.mxu0 %v1079
      %1283 = vmatpush1.bf16.msra.mxu0 %v1078
      %1284 = vmatprep.subr.bf16.mxu0 %v1086
      %1285 = vmatpush1.bf16.msra.mxu0 %v1085
      %1286 = vmatprep.subr.bf16.mxu0 %v1093
      %1287 = vmatpush1.bf16.msra.mxu0 %v1092
      %1288 = vmatprep.subr.bf16.mxu0 %v1100
      %1289 = vmatpush1.bf16.msra.mxu0 %v1099
      %1290 = vmatprep.subr.bf16.mxu0 %v1107
      %1291 = vmatpush1.bf16.msra.mxu0 %v1106
      %1292 = vmatprep.subr.bf16.mxu0 %v1114
      %1293 = vmatpush1.bf16.msra.mxu0 %v1113
      %1294 = vmatprep.subr.bf16.mxu0 %v1121
      %1295 = vmatpush1.bf16.msra.mxu0 %v1120
      %1296 = vmatprep.subr.bf16.mxu0 %v1128
      %1297 = vmatpush1.bf16.msra.mxu0 %v1127
      %1298 = vmatprep.subr.bf16.mxu0 %v1135
      %1299 = vmatpush1.bf16.msra.mxu0 %v1134
      %1300 = vmatprep.subr.bf16.mxu0 %v1142
      %1301 = vmatpush1.bf16.msra.mxu0 %v1141
      %1302 = vmatprep.subr.bf16.mxu0 %v1149
      %1303 = vmatpush1.bf16.msra.mxu0 %v1148
      %1304 = vmatprep.subr.bf16.mxu0 %v1156
      %1305 = vmatpush1.bf16.msra.mxu0 %v1155
      %1306 = vmatprep.mubr.bf16.mxu0 %v518
      %1307 = vmatmul.mubr.bf16.gmra.mrb[0].mxu0 %v517
      %v1308 = vpop.f32.mrb[0].mxu0
      %v1309 = vadd.f32 %v666, %v1308
      %v1310 = vpop.f32.mrb[0].mxu0
      %v1311 = vadd.f32 %v670, %v1310
      %v1312 = vpop.f32.mrb[0].mxu0
      %v1313 = vadd.f32 %v666, %v1312
      %v1314 = vpop.f32.mrb[0].mxu0
      %v1315 = vadd.f32 %v670, %v1314
      %1316 = vmatprep.mubr.bf16.mxu0 %v520
      %1317 = vmatmul.mubr.bf16.gmra.mrb[0].mxu0 %v519
      %v1318 = vpop.f32.mrb[0].mxu0
      %v1319 = vadd.f32 %v666, %v1318
      %v1320 = vpop.f32.mrb[0].mxu0
      %v1321 = vadd.f32 %v670, %v1320
      %v1322 = vpop.f32.mrb[0].mxu0
      %v1323 = vadd.f32 %v666, %v1322
      %v1324 = vpop.f32.mrb[0].mxu0
      %v1325 = vadd.f32 %v670, %v1324
      %1326 = vmatprep.mubr.bf16.mxu0 %v522
      %1327 = vmatmul.mubr.bf16.gmra.mrb[0].mxu0 %v521
      %v1328 = vpop.f32.mrb[0].mxu0
      %v1329 = vadd.f32 %v666, %v1328
      %v1330 = vpop.f32.mrb[0].mxu0
      %v1331 = vadd.f32 %v670, %v1330
      %v1332 = vpop.f32.mrb[0].mxu0
      %v1333 = vadd.f32 %v666, %v1332
      %v1334 = vpop.f32.mrb[0].mxu0
      %v1335 = vadd.f32 %v670, %v1334
      %1336 = vmatprep.mubr.bf16.mxu0 %v524
      %1337 = vmatmul.mubr.bf16.gmra.mrb[0].mxu0 %v523
      %v1338 = vpop.f32.mrb[0].mxu0
      %v1339 = vadd.f32 %v666, %v1338
      %v1340 = vpop.f32.mrb[0].mxu0
      %v1341 = vadd.f32 %v670, %v1340
      %v1342 = vpop.f32.mrb[0].mxu0
      %v1343 = vadd.f32 %v666, %v1342
      %v1344 = vpop.f32.mrb[0].mxu0
      %v1345 = vadd.f32 %v670, %v1344
      %1346 = vmatprep.mubr.bf16.mxu0 %v526
      %1347 = vmatmul.mubr.bf16.gmra.mrb[0].mxu0 %v525
      %v1348 = vpop.f32.mrb[0].mxu0
      %v1349 = vadd.f32 %v666, %v1348
      %v1350 = vpop.f32.mrb[0].mxu0
      %v1351 = vadd.f32 %v670, %v1350
      %v1352 = vpop.f32.mrb[0].mxu0
      %v1353 = vadd.f32 %v666, %v1352
      %v1354 = vpop.f32.mrb[0].mxu0
      %v1355 = vadd.f32 %v670, %v1354
      %1356 = vmatprep.mubr.bf16.mxu0 %v528
      %1357 = vmatmul.mubr.bf16.gmra.mrb[0].mxu0 %v527
      %v1358 = vpop.f32.mrb[0].mxu0
      %v1359 = vadd.f32 %v666, %v1358
      %v1360 = vpop.f32.mrb[0].mxu0
      %v1361 = vadd.f32 %v670, %v1360
      %v1362 = vpop.f32.mrb[0].mxu0
      %v1363 = vadd.f32 %v666, %v1362
      %v1364 = vpop.f32.mrb[0].mxu0
      %v1365 = vadd.f32 %v670, %v1364
      %1366 = vmatprep.mubr.bf16.mxu0 %v530
      %1367 = vmatmul.mubr.bf16.gmra.mrb[0].mxu0 %v529
      %v1368 = vpop.f32.mrb[0].mxu0
      %v1369 = vadd.f32 %v666, %v1368
      %v1370 = vpop.f32.mrb[0].mxu0
      %v1371 = vadd.f32 %v670, %v1370
      %v1372 = vpop.f32.mrb[0].mxu0
      %v1373 = vadd.f32 %v666, %v1372
      %v1374 = vpop.f32.mrb[0].mxu0
      %v1375 = vadd.f32 %v670, %v1374
      %1376 = vmatprep.mubr.bf16.mxu0 %v532
      %1377 = vmatmul.mubr.bf16.gmra.mrb[0].mxu0 %v531
      %v1378 = vpop.f32.mrb[0].mxu0
      %v1379 = vadd.f32 %v666, %v1378
      %v1380 = vpop.f32.mrb[0].mxu0
      %v1381 = vadd.f32 %v670, %v1380
      %v1382 = vpop.f32.mrb[0].mxu0
      %v1383 = vadd.f32 %v666, %v1382
      %v1384 = vpop.f32.mrb[0].mxu0
      %v1385 = vadd.f32 %v670, %v1384
      %1386 = vdwg.mxu0
      %1387 = vmatprep.subr.bf16.mxu0 %v1053
      %1388 = vmatpush1.bf16.msra.mxu0 %v1052
      %1389 = vmatprep.subr.bf16.mxu0 %v1060
      %1390 = vmatpush1.bf16.msra.mxu0 %v1059
      %1391 = vmatprep.subr.bf16.mxu0 %v1067
      %1392 = vmatpush1.bf16.msra.mxu0 %v1066
      %1393 = vmatprep.subr.bf16.mxu0 %v1074
      %1394 = vmatpush1.bf16.msra.mxu0 %v1073
      %1395 = vmatprep.subr.bf16.mxu0 %v1081
      %1396 = vmatpush1.bf16.msra.mxu0 %v1080
      %1397 = vmatprep.subr.bf16.mxu0 %v1088
      %1398 = vmatpush1.bf16.msra.mxu0 %v1087
      %1399 = vmatprep.subr.bf16.mxu0 %v1095
      %1400 = vmatpush1.bf16.msra.mxu0 %v1094
      %1401 = vmatprep.subr.bf16.mxu0 %v1102
      %1402 = vmatpush1.bf16.msra.mxu0 %v1101
      %1403 = vmatprep.subr.bf16.mxu0 %v1109
      %1404 = vmatpush1.bf16.msra.mxu0 %v1108
      %1405 = vmatprep.subr.bf16.mxu0 %v1116
      %1406 = vmatpush1.bf16.msra.mxu0 %v1115
      %1407 = vmatprep.subr.bf16.mxu0 %v1123
      %1408 = vmatpush1.bf16.msra.mxu0 %v1122
      %1409 = vmatprep.subr.bf16.mxu0 %v1130
      %1410 = vmatpush1.bf16.msra.mxu0 %v1129
      %1411 = vmatprep.subr.bf16.mxu0 %v1137
      %1412 = vmatpush1.bf16.msra.mxu0 %v1136
      %1413 = vmatprep.subr.bf16.mxu0 %v1144
      %1414 = vmatpush1.bf16.msra.mxu0 %v1143
      %1415 = vmatprep.subr.bf16.mxu0 %v1151
      %1416 = vmatpush1.bf16.msra.mxu0 %v1150
      %1417 = vmatprep.subr.bf16.mxu0 %v1158
      %1418 = vmatpush1.bf16.msra.mxu0 %v1157
      %1419 = vmatprep.mubr.bf16.mxu0 %v518
      %1420 = vmatmul.mubr.bf16.gmra.mrb[0].mxu0 %v517
      %v1421 = vpop.f32.mrb[0].mxu0
      %v1422 = vadd.f32 %v674, %v1421
      %v1423 = vpop.f32.mrb[0].mxu0
      %v1424 = vadd.f32 %v678, %v1423
      %v1425 = vpop.f32.mrb[0].mxu0
      %v1426 = vadd.f32 %v674, %v1425
      %v1427 = vpop.f32.mrb[0].mxu0
      %v1428 = vadd.f32 %v678, %v1427
      %1429 = vmatprep.mubr.bf16.mxu0 %v520
      %1430 = vmatmul.mubr.bf16.gmra.mrb[0].mxu0 %v519
      %v1431 = vpop.f32.mrb[0].mxu0
      %v1432 = vadd.f32 %v674, %v1431
      %v1433 = vpop.f32.mrb[0].mxu0
      %v1434 = vadd.f32 %v678, %v1433
      %v1435 = vpop.f32.mrb[0].mxu0
      %v1436 = vadd.f32 %v674, %v1435
      %v1437 = vpop.f32.mrb[0].mxu0
      %v1438 = vadd.f32 %v678, %v1437
      %1439 = vmatprep.mubr.bf16.mxu0 %v522
      %1440 = vmatmul.mubr.bf16.gmra.mrb[0].mxu0 %v521
      %v1441 = vpop.f32.mrb[0].mxu0
      %v1442 = vadd.f32 %v674, %v1441
      %v1443 = vpop.f32.mrb[0].mxu0
      %v1444 = vadd.f32 %v678, %v1443
      %v1445 = vpop.f32.mrb[0].mxu0
      %v1446 = vadd.f32 %v674, %v1445
      %v1447 = vpop.f32.mrb[0].mxu0
      %v1448 = vadd.f32 %v678, %v1447
      %1449 = vmatprep.mubr.bf16.mxu0 %v524
      %1450 = vmatmul.mubr.bf16.gmra.mrb[0].mxu0 %v523
      %v1451 = vpop.f32.mrb[0].mxu0
      %v1452 = vadd.f32 %v674, %v1451
      %v1453 = vpop.f32.mrb[0].mxu0
      %v1454 = vadd.f32 %v678, %v1453
      %v1455 = vpop.f32.mrb[0].mxu0
      %v1456 = vadd.f32 %v674, %v1455
      %v1457 = vpop.f32.mrb[0].mxu0
      %v1458 = vadd.f32 %v678, %v1457
      %1459 = vmatprep.mubr.bf16.mxu0 %v526
      %1460 = vmatmul.mubr.bf16.gmra.mrb[0].mxu0 %v525
      %v1461 = vpop.f32.mrb[0].mxu0
      %v1462 = vadd.f32 %v674, %v1461
      %v1463 = vpop.f32.mrb[0].mxu0
      %v1464 = vadd.f32 %v678, %v1463
      %v1465 = vpop.f32.mrb[0].mxu0
      %v1466 = vadd.f32 %v674, %v1465
      %v1467 = vpop.f32.mrb[0].mxu0
      %v1468 = vadd.f32 %v678, %v1467
      %1469 = vmatprep.mubr.bf16.mxu0 %v528
      %1470 = vmatmul.mubr.bf16.gmra.mrb[0].mxu0 %v527
      %v1471 = vpop.f32.mrb[0].mxu0
      %v1472 = vadd.f32 %v674, %v1471
      %v1473 = vpop.f32.mrb[0].mxu0
      %v1474 = vadd.f32 %v678, %v1473
      %v1475 = vpop.f32.mrb[0].mxu0
      %v1476 = vadd.f32 %v674, %v1475
      %v1477 = vpop.f32.mrb[0].mxu0
      %v1478 = vadd.f32 %v678, %v1477
      %1479 = vmatprep.mubr.bf16.mxu0 %v530
      %1480 = vmatmul.mubr.bf16.gmra.mrb[0].mxu0 %v529
      %v1481 = vpop.f32.mrb[0].mxu0
      %v1482 = vadd.f32 %v674, %v1481
      %v1483 = vpop.f32.mrb[0].mxu0
      %v1484 = vadd.f32 %v678, %v1483
      %v1485 = vpop.f32.mrb[0].mxu0
      %v1486 = vadd.f32 %v674, %v1485
      %v1487 = vpop.f32.mrb[0].mxu0
      %v1488 = vadd.f32 %v678, %v1487
      %1489 = vmatprep.mubr.bf16.mxu0 %v532
      %1490 = vmatmul.mubr.bf16.gmra.mrb[0].mxu0 %v531
      %v1491 = vpop.f32.mrb[0].mxu0
      %v1492 = vadd.f32 %v674, %v1491
      %v1493 = vpop.f32.mrb[0].mxu0
      %v1494 = vadd.f32 %v678, %v1493
      %v1495 = vpop.f32.mrb[0].mxu0
      %v1496 = vadd.f32 %v674, %v1495
      %v1497 = vpop.f32.mrb[0].mxu0
      %v1498 = vadd.f32 %v678, %v1497
      %1499 = vdwg.mxu0
      %1500 = vmatprep.subr.bf16.mxu0 %v1055
      %1501 = vmatpush1.bf16.msra.mxu0 %v1054
      %1502 = vmatprep.subr.bf16.mxu0 %v1062
      %1503 = vmatpush1.bf16.msra.mxu0 %v1061
      %1504 = vmatprep.subr.bf16.mxu0 %v1069
      %1505 = vmatpush1.bf16.msra.mxu0 %v1068
      %1506 = vmatprep.subr.bf16.mxu0 %v1076
      %1507 = vmatpush1.bf16.msra.mxu0 %v1075
      %1508 = vmatprep.subr.bf16.mxu0 %v1083
      %1509 = vmatpush1.bf16.msra.mxu0 %v1082
      %1510 = vmatprep.subr.bf16.mxu0 %v1090
      %1511 = vmatpush1.bf16.msra.mxu0 %v1089
      %1512 = vmatprep.subr.bf16.mxu0 %v1097
      %1513 = vmatpush1.bf16.msra.mxu0 %v1096
      %1514 = vmatprep.subr.bf16.mxu0 %v1104
      %1515 = vmatpush1.bf16.msra.mxu0 %v1103
      %1516 = vmatprep.subr.bf16.mxu0 %v1111
      %1517 = vmatpush1.bf16.msra.mxu0 %v1110
      %1518 = vmatprep.subr.bf16.mxu0 %v1118
      %1519 = vmatpush1.bf16.msra.mxu0 %v1117
      %1520 = vmatprep.subr.bf16.mxu0 %v1125
      %1521 = vmatpush1.bf16.msra.mxu0 %v1124
      %1522 = vmatprep.subr.bf16.mxu0 %v1132
      %1523 = vmatpush1.bf16.msra.mxu0 %v1131
      %1524 = vmatprep.subr.bf16.mxu0 %v1139
      %1525 = vmatpush1.bf16.msra.mxu0 %v1138
      %1526 = vmatprep.subr.bf16.mxu0 %v1146
      %1527 = vmatpush1.bf16.msra.mxu0 %v1145
      %1528 = vmatprep.subr.bf16.mxu0 %v1153
      %1529 = vmatpush1.bf16.msra.mxu0 %v1152
      %1530 = vmatprep.subr.bf16.mxu0 %v1160
      %1531 = vmatpush1.bf16.msra.mxu0 %v1159
      %1532 = vmatprep.mubr.bf16.mxu0 %v518
      %1533 = vmatmul.mubr.bf16.gmra.mrb[0].mxu0 %v517
      %v1534 = vpop.f32.mrb[0].mxu0
      %v1535 = vadd.f32 %v682, %v1534
      %v1536 = vpop.f32.mrb[0].mxu0
      %v1537 = vadd.f32 %v686, %v1536
      %v1538 = vpop.f32.mrb[0].mxu0
      %v1539 = vadd.f32 %v682, %v1538
      %v1540 = vpop.f32.mrb[0].mxu0
      %v1541 = vadd.f32 %v686, %v1540
      %1542 = vmatprep.mubr.bf16.mxu0 %v520
      %1543 = vmatmul.mubr.bf16.gmra.mrb[0].mxu0 %v519
      %v1544 = vpop.f32.mrb[0].mxu0
      %v1545 = vadd.f32 %v682, %v1544
      %v1546 = vpop.f32.mrb[0].mxu0
      %v1547 = vadd.f32 %v686, %v1546
      %v1548 = vpop.f32.mrb[0].mxu0
      %v1549 = vadd.f32 %v682, %v1548
      %v1550 = vpop.f32.mrb[0].mxu0
      %v1551 = vadd.f32 %v686, %v1550
      %1552 = vmatprep.mubr.bf16.mxu0 %v522
      %1553 = vmatmul.mubr.bf16.gmra.mrb[0].mxu0 %v521
      %v1554 = vpop.f32.mrb[0].mxu0
      %v1555 = vadd.f32 %v682, %v1554
      %v1556 = vpop.f32.mrb[0].mxu0
      %v1557 = vadd.f32 %v686, %v1556
      %v1558 = vpop.f32.mrb[0].mxu0
      %v1559 = vadd.f32 %v682, %v1558
      %v1560 = vpop.f32.mrb[0].mxu0
      %v1561 = vadd.f32 %v686, %v1560
      %1562 = vmatprep.mubr.bf16.mxu0 %v524
      %1563 = vmatmul.mubr.bf16.gmra.mrb[0].mxu0 %v523
      %v1564 = vpop.f32.mrb[0].mxu0
      %v1565 = vadd.f32 %v682, %v1564
      %v1566 = vpop.f32.mrb[0].mxu0
      %v1567 = vadd.f32 %v686, %v1566
      %v1568 = vpop.f32.mrb[0].mxu0
      %v1569 = vadd.f32 %v682, %v1568
      %v1570 = vpop.f32.mrb[0].mxu0
      %v1571 = vadd.f32 %v686, %v1570
      %1572 = vmatprep.mubr.bf16.mxu0 %v526
      %1573 = vmatmul.mubr.bf16.gmra.mrb[0].mxu0 %v525
      %v1574 = vpop.f32.mrb[0].mxu0
      %v1575 = vadd.f32 %v682, %v1574
      %v1576 = vpop.f32.mrb[0].mxu0
      %v1577 = vadd.f32 %v686, %v1576
      %v1578 = vpop.f32.mrb[0].mxu0
      %v1579 = vadd.f32 %v682, %v1578
      %v1580 = vpop.f32.mrb[0].mxu0
      %v1581 = vadd.f32 %v686, %v1580
      %1582 = vmatprep.mubr.bf16.mxu0 %v528
      %1583 = vmatmul.mubr.bf16.gmra.mrb[0].mxu0 %v527
      %v1584 = vpop.f32.mrb[0].mxu0
      %v1585 = vadd.f32 %v682, %v1584
      %v1586 = vpop.f32.mrb[0].mxu0
      %v1587 = vadd.f32 %v686, %v1586
      %v1588 = vpop.f32.mrb[0].mxu0
      %v1589 = vadd.f32 %v682, %v1588
      %v1590 = vpop.f32.mrb[0].mxu0
      %v1591 = vadd.f32 %v686, %v1590
      %1592 = vmatprep.mubr.bf16.mxu0 %v530
      %1593 = vmatmul.mubr.bf16.gmra.mrb[0].mxu0 %v529
      %v1594 = vpop.f32.mrb[0].mxu0
      %v1595 = vadd.f32 %v682, %v1594
      %v1596 = vpop.f32.mrb[0].mxu0
      %v1597 = vadd.f32 %v686, %v1596
      %v1598 = vpop.f32.mrb[0].mxu0
      %v1599 = vadd.f32 %v682, %v1598
      %v1600 = vpop.f32.mrb[0].mxu0
      %v1601 = vadd.f32 %v686, %v1600
      %1602 = vmatprep.mubr.bf16.mxu0 %v532
      %1603 = vmatmul.mubr.bf16.gmra.mrb[0].mxu0 %v531
      %v1604 = vpop.f32.mrb[0].mxu0
      %v1605 = vadd.f32 %v682, %v1604
      %v1606 = vpop.f32.mrb[0].mxu0
      %v1607 = vadd.f32 %v686, %v1606
      %v1608 = vpop.f32.mrb[0].mxu0
      %v1609 = vadd.f32 %v682, %v1608
      %v1610 = vpop.f32.mrb[0].mxu0
      %v1611 = vadd.f32 %v686, %v1610
      %1612 = vdwg.mxu0
      %1613 = vmatprep.subr.bf16.mxu0 0
      %1614 = vmatpush1.bf16.msra.mxu0 %v1056
      %1615 = vmatprep.subr.bf16.mxu0 0
      %1616 = vmatpush1.bf16.msra.mxu0 %v1063
      %1617 = vmatprep.subr.bf16.mxu0 0
      %1618 = vmatpush1.bf16.msra.mxu0 %v1070
      %1619 = vmatprep.subr.bf16.mxu0 0
      %1620 = vmatpush1.bf16.msra.mxu0 %v1077
      %1621 = vmatprep.subr.bf16.mxu0 0
      %1622 = vmatpush1.bf16.msra.mxu0 %v1084
      %1623 = vmatprep.subr.bf16.mxu0 0
      %1624 = vmatpush1.bf16.msra.mxu0 %v1091
      %1625 = vmatprep.subr.bf16.mxu0 0
      %1626 = vmatpush1.bf16.msra.mxu0 %v1098
      %1627 = vmatprep.subr.bf16.mxu0 0
      %1628 = vmatpush1.bf16.msra.mxu0 %v1105
      %1629 = vmatprep.subr.bf16.mxu0 0
      %1630 = vmatpush1.bf16.msra.mxu0 %v1112
      %1631 = vmatprep.subr.bf16.mxu0 0
      %1632 = vmatpush1.bf16.msra.mxu0 %v1119
      %1633 = vmatprep.subr.bf16.mxu0 0
      %1634 = vmatpush1.bf16.msra.mxu0 %v1126
      %1635 = vmatprep.subr.bf16.mxu0 0
      %1636 = vmatpush1.bf16.msra.mxu0 %v1133
      %1637 = vmatprep.subr.bf16.mxu0 0
      %1638 = vmatpush1.bf16.msra.mxu0 %v1140
      %1639 = vmatprep.subr.bf16.mxu0 0
      %1640 = vmatpush1.bf16.msra.mxu0 %v1147
      %1641 = vmatprep.subr.bf16.mxu0 0
      %1642 = vmatpush1.bf16.msra.mxu0 %v1154
      %1643 = vmatprep.subr.bf16.mxu0 0
      %1644 = vmatpush1.bf16.msra.mxu0 %v1161
      %1645 = vmatprep.mubr.bf16.mxu0 %v518
      %1646 = vmatmul.mubr.bf16.gmra.mrb[0].mxu0 %v517
      %v1647 = vpop.f32.mrb[0].mxu0
      %v1648 = vadd.f32 %v690, %v1647
      %v1649 = vpop.f32.mrb[0].mxu0
      %v1650 = vpop.f32.mrb[0].mxu0
      %v1651 = vadd.f32 %v690, %v1650
      %v1652 = vpop.f32.mrb[0].mxu0
      %1653 = vmatprep.mubr.bf16.mxu0 %v520
      %1654 = vmatmul.mubr.bf16.gmra.mrb[0].mxu0 %v519
      %v1655 = vpop.f32.mrb[0].mxu0
      %v1656 = vadd.f32 %v690, %v1655
      %v1657 = vpop.f32.mrb[0].mxu0
      %v1658 = vpop.f32.mrb[0].mxu0
      %v1659 = vadd.f32 %v690, %v1658
      %v1660 = vpop.f32.mrb[0].mxu0
      %1661 = vmatprep.mubr.bf16.mxu0 %v522
      %1662 = vmatmul.mubr.bf16.gmra.mrb[0].mxu0 %v521
      %v1663 = vpop.f32.mrb[0].mxu0
      %v1664 = vadd.f32 %v690, %v1663
      %v1665 = vpop.f32.mrb[0].mxu0
      %v1666 = vpop.f32.mrb[0].mxu0
      %v1667 = vadd.f32 %v690, %v1666
      %v1668 = vpop.f32.mrb[0].mxu0
      %1669 = vmatprep.mubr.bf16.mxu0 %v524
      %1670 = vmatmul.mubr.bf16.gmra.mrb[0].mxu0 %v523
      %v1671 = vpop.f32.mrb[0].mxu0
      %v1672 = vadd.f32 %v690, %v1671
      %v1673 = vpop.f32.mrb[0].mxu0
      %v1674 = vpop.f32.mrb[0].mxu0
      %v1675 = vadd.f32 %v690, %v1674
      %v1676 = vpop.f32.mrb[0].mxu0
      %1677 = vmatprep.mubr.bf16.mxu0 %v526
      %1678 = vmatmul.mubr.bf16.gmra.mrb[0].mxu0 %v525
      %v1679 = vpop.f32.mrb[0].mxu0
      %v1680 = vadd.f32 %v690, %v1679
      %v1681 = vpop.f32.mrb[0].mxu0
      %v1682 = vpop.f32.mrb[0].mxu0
      %v1683 = vadd.f32 %v690, %v1682
      %v1684 = vpop.f32.mrb[0].mxu0
      %1685 = vmatprep.mubr.bf16.mxu0 %v528
      %1686 = vmatmul.mubr.bf16.gmra.mrb[0].mxu0 %v527
      %v1687 = vpop.f32.mrb[0].mxu0
      %v1688 = vadd.f32 %v690, %v1687
      %v1689 = vpop.f32.mrb[0].mxu0
      %v1690 = vpop.f32.mrb[0].mxu0
      %v1691 = vadd.f32 %v690, %v1690
      %v1692 = vpop.f32.mrb[0].mxu0
      %1693 = vmatprep.mubr.bf16.mxu0 %v530
      %1694 = vmatmul.mubr.bf16.gmra.mrb[0].mxu0 %v529
      %v1695 = vpop.f32.mrb[0].mxu0
      %v1696 = vadd.f32 %v690, %v1695
      %v1697 = vpop.f32.mrb[0].mxu0
      %v1698 = vpop.f32.mrb[0].mxu0
      %v1699 = vadd.f32 %v690, %v1698
      %v1700 = vpop.f32.mrb[0].mxu0
      %1701 = vmatprep.mubr.bf16.mxu0 %v532
      %1702 = vmatmul.mubr.bf16.gmra.mrb[0].mxu0 %v531
      %v1703 = vpop.f32.mrb[0].mxu0
      %v1704 = vadd.f32 %v690, %v1703
      %v1705 = vpop.f32.mrb[0].mxu0
      %v1706 = vpop.f32.mrb[0].mxu0
      %v1707 = vadd.f32 %v690, %v1706
      %v1708 = vpop.f32.mrb[0].mxu0
      %1709 = vdwg.mxu0
      %v1710 = vtanh.pop %v1309
      %v1711 = vtanh.pop %v1311
      %v1712 = vtanh.pop %v1422
      %v1713 = vtanh.pop %v1424
      %v1714 = vtanh.pop %v1535
      %v1715 = vtanh.pop %v1537
      %v1716 = vtanh.pop %v1648
      %v1717 = vtanh.pop %v1313
      %v1718 = vtanh.pop %v1315
      %v1719 = vtanh.pop %v1426
      %v1720 = vtanh.pop %v1428
      %v1721 = vtanh.pop %v1539
      %v1722 = vtanh.pop %v1541
      %v1723 = vtanh.pop %v1651
      %v1724 = vtanh.pop %v1319
      %v1725 = vtanh.pop %v1321
      %v1726 = vtanh.pop %v1432
      %v1727 = vtanh.pop %v1434
      %v1728 = vtanh.pop %v1545
      %v1729 = vtanh.pop %v1547
      %v1730 = vtanh.pop %v1656
      %v1731 = vtanh.pop %v1323
      %v1732 = vtanh.pop %v1325
      %v1733 = vtanh.pop %v1436
      %v1734 = vtanh.pop %v1438
      %v1735 = vtanh.pop %v1549
      %v1736 = vtanh.pop %v1551
      %v1737 = vtanh.pop %v1659
      %v1738 = vtanh.pop %v1329
      %v1739 = vtanh.pop %v1331
      %v1740 = vtanh.pop %v1442
      %v1741 = vtanh.pop %v1444
      %v1742 = vtanh.pop %v1555
      %v1743 = vtanh.pop %v1557
      %v1744 = vtanh.pop %v1664
      %v1745 = vtanh.pop %v1333
      %v1746 = vtanh.pop %v1335
      %v1747 = vtanh.pop %v1446
      %v1748 = vtanh.pop %v1448
      %v1749 = vtanh.pop %v1559
      %v1750 = vtanh.pop %v1561
      %v1751 = vtanh.pop %v1667
      %v1752 = vtanh.pop %v1339
      %v1753 = vtanh.pop %v1341
      %v1754 = vtanh.pop %v1452
      %v1755 = vtanh.pop %v1454
      %v1756 = vtanh.pop %v1565
      %v1757 = vtanh.pop %v1567
      %v1758 = vtanh.pop %v1672
      %v1759 = vtanh.pop %v1343
      %v1760 = vtanh.pop %v1345
      %v1761 = vtanh.pop %v1456
      %v1762 = vtanh.pop %v1458
      %v1763 = vtanh.pop %v1569
      %v1764 = vtanh.pop %v1571
      %v1765 = vtanh.pop %v1675
      %v1766 = vtanh.pop %v1349
      %v1767 = vtanh.pop %v1351
      %v1768 = vtanh.pop %v1462
      %v1769 = vtanh.pop %v1464
      %v1770 = vtanh.pop %v1575
      %v1771 = vtanh.pop %v1577
      %v1772 = vtanh.pop %v1680
      %v1773 = vtanh.pop %v1353
      %v1774 = vtanh.pop %v1355
      %v1775 = vtanh.pop %v1466
      %v1776 = vtanh.pop %v1468
      %v1777 = vtanh.pop %v1579
      %v1778 = vtanh.pop %v1581
      %v1779 = vtanh.pop %v1683
      %v1780 = vtanh.pop %v1359
      %v1781 = vtanh.pop %v1361
      %v1782 = vtanh.pop %v1472
      %v1783 = vtanh.pop %v1474
      %v1784 = vtanh.pop %v1585
      %v1785 = vtanh.pop %v1587
      %v1786 = vtanh.pop %v1688
      %v1787 = vtanh.pop %v1363
      %v1788 = vtanh.pop %v1365
      %v1789 = vtanh.pop %v1476
      %v1790 = vtanh.pop %v1478
      %v1791 = vtanh.pop %v1589
      %v1792 = vtanh.pop %v1591
      %v1793 = vtanh.pop %v1691
      %v1794 = vtanh.pop %v1369
      %v1795 = vtanh.pop %v1371
      %v1796 = vtanh.pop %v1482
      %v1797 = vtanh.pop %v1484
      %v1798 = vtanh.pop %v1595
      %v1799 = vtanh.pop %v1597
      %v1800 = vtanh.pop %v1696
      %v1801 = vtanh.pop %v1373
      %v1802 = vtanh.pop %v1375
      %v1803 = vtanh.pop %v1486
      %v1804 = vtanh.pop %v1488
      %v1805 = vtanh.pop %v1599
      %v1806 = vtanh.pop %v1601
      %v1807 = vtanh.pop %v1699
      %v1808 = vtanh.pop %v1379
      %v1809 = vtanh.pop %v1381
      %v1810 = vtanh.pop %v1492
      %v1811 = vtanh.pop %v1494
      %v1812 = vtanh.pop %v1605
      %v1813 = vtanh.pop %v1607
      %v1814 = vtanh.pop %v1704
      %v1815 = vtanh.pop %v1383
      %v1816 = vtanh.pop %v1385
      %v1817 = vtanh.pop %v1496
      %v1818 = vtanh.pop %v1498
      %v1819 = vtanh.pop %v1609
      %v1820 = vtanh.pop %v1611
      %v1821 = vtanh.pop %v1707
      %1822 = vst [vmem:[%s228] sm:$0xff] %v1710
      %1823 = vst [vmem:[%s228 + $0x8] sm:$0xff] %v1711
      %1824 = vst [vmem:[%s228 + $0x10] sm:$0xff] %v1712
      %1825 = vst [vmem:[%s228 + $0x18] sm:$0xff] %v1713
      %1826 = vst [vmem:[%s228 + $0x20] sm:$0xff] %v1714
      %1827 = vst [vmem:[%s228 + $0x28] sm:$0xff] %v1715
      %vm1828 = vcmask 130048
      %1829 = vst.msk [vmem:[%s228 + $0x30] sm:$0xff] %vm1828, %v1716
      %1830 = vst [vmem:[%s228 + $0x38] sm:$0xff] %v1717
      %1831 = vst [vmem:[%s228 + $0x40] sm:$0xff] %v1718
      %1832 = vst [vmem:[%s228 + $0x48] sm:$0xff] %v1719
      %1833 = vst [vmem:[%s228 + $0x50] sm:$0xff] %v1720
      %1834 = vst [vmem:[%s228 + $0x58] sm:$0xff] %v1721
      %1835 = vst [vmem:[%s228 + $0x60] sm:$0xff] %v1722
      %1836 = vst.msk [vmem:[%s228 + $0x68] sm:$0xff] %vm1828, %v1723
      %1837 = vst [vmem:[%s228 + $0x70] sm:$0xff] %v1724
      %1838 = vst [vmem:[%s228 + $0x78] sm:$0xff] %v1725
      %1839 = vst [vmem:[%s228 + $0x80] sm:$0xff] %v1726
      %1840 = vst [vmem:[%s228 + $0x88] sm:$0xff] %v1727
      %1841 = vst [vmem:[%s228 + $0x90] sm:$0xff] %v1728
      %1842 = vst [vmem:[%s228 + $0x98] sm:$0xff] %v1729
      %1843 = vst.msk [vmem:[%s228 + $0xa0] sm:$0xff] %vm1828, %v1730
      %1844 = vst [vmem:[%s228 + $0xa8] sm:$0xff] %v1731
      %1845 = vst [vmem:[%s228 + $0xb0] sm:$0xff] %v1732
      %1846 = vst [vmem:[%s228 + $0xb8] sm:$0xff] %v1733
      %1847 = vst [vmem:[%s228 + $0xc0] sm:$0xff] %v1734
      %1848 = vst [vmem:[%s228 + $0xc8] sm:$0xff] %v1735
      %1849 = vst [vmem:[%s228 + $0xd0] sm:$0xff] %v1736
      %1850 = vst.msk [vmem:[%s228 + $0xd8] sm:$0xff] %vm1828, %v1737
      %1851 = vst [vmem:[%s228 + $0xe0] sm:$0xff] %v1738
      %1852 = vst [vmem:[%s228 + $0xe8] sm:$0xff] %v1739
      %1853 = vst [vmem:[%s228 + $0xf0] sm:$0xff] %v1740
      %1854 = vst [vmem:[%s228 + $0xf8] sm:$0xff] %v1741
      %1855 = vst [vmem:[%s228 + $0x100] sm:$0xff] %v1742
      %1856 = vst [vmem:[%s228 + $0x108] sm:$0xff] %v1743
      %1857 = vst.msk [vmem:[%s228 + $0x110] sm:$0xff] %vm1828, %v1744
      %1858 = vst [vmem:[%s228 + $0x118] sm:$0xff] %v1745
      %1859 = vst [vmem:[%s228 + $0x120] sm:$0xff] %v1746
      %1860 = vst [vmem:[%s228 + $0x128] sm:$0xff] %v1747
      %1861 = vst [vmem:[%s228 + $0x130] sm:$0xff] %v1748
      %1862 = vst [vmem:[%s228 + $0x138] sm:$0xff] %v1749
      %1863 = vst [vmem:[%s228 + $0x140] sm:$0xff] %v1750
      %1864 = vst.msk [vmem:[%s228 + $0x148] sm:$0xff] %vm1828, %v1751
      %1865 = vst [vmem:[%s228 + $0x150] sm:$0xff] %v1752
      %1866 = vst [vmem:[%s228 + $0x158] sm:$0xff] %v1753
      %1867 = vst [vmem:[%s228 + $0x160] sm:$0xff] %v1754
      %1868 = vst [vmem:[%s228 + $0x168] sm:$0xff] %v1755
      %1869 = vst [vmem:[%s228 + $0x170] sm:$0xff] %v1756
      %1870 = vst [vmem:[%s228 + $0x178] sm:$0xff] %v1757
      %1871 = vst.msk [vmem:[%s228 + $0x180] sm:$0xff] %vm1828, %v1758
      %1872 = vst [vmem:[%s228 + $0x188] sm:$0xff] %v1759
      %1873 = vst [vmem:[%s228 + $0x190] sm:$0xff] %v1760
      %1874 = vst [vmem:[%s228 + $0x198] sm:$0xff] %v1761
      %1875 = vst [vmem:[%s228 + $0x1a0] sm:$0xff] %v1762
      %1876 = vst [vmem:[%s228 + $0x1a8] sm:$0xff] %v1763
      %1877 = vst [vmem:[%s228 + $0x1b0] sm:$0xff] %v1764
      %1878 = vst.msk [vmem:[%s228 + $0x1b8] sm:$0xff] %vm1828, %v1765
      %1879 = vst [vmem:[%s228 + $0x1c0] sm:$0xff] %v1766
      %1880 = vst [vmem:[%s228 + $0x1c8] sm:$0xff] %v1767
      %1881 = vst [vmem:[%s228 + $0x1d0] sm:$0xff] %v1768
      %1882 = vst [vmem:[%s228 + $0x1d8] sm:$0xff] %v1769
      %1883 = vst [vmem:[%s228 + $0x1e0] sm:$0xff] %v1770
      %1884 = vst [vmem:[%s228 + $0x1e8] sm:$0xff] %v1771
      %1885 = vst.msk [vmem:[%s228 + $0x1f0] sm:$0xff] %vm1828, %v1772
      %1886 = vst [vmem:[%s228 + $0x1f8] sm:$0xff] %v1773
      %1887 = vst [vmem:[%s228 + $0x200] sm:$0xff] %v1774
      %1888 = vst [vmem:[%s228 + $0x208] sm:$0xff] %v1775
      %1889 = vst [vmem:[%s228 + $0x210] sm:$0xff] %v1776
      %1890 = vst [vmem:[%s228 + $0x218] sm:$0xff] %v1777
      %1891 = vst [vmem:[%s228 + $0x220] sm:$0xff] %v1778
      %1892 = vst.msk [vmem:[%s228 + $0x228] sm:$0xff] %vm1828, %v1779
      %1893 = vst [vmem:[%s228 + $0x230] sm:$0xff] %v1780
      %1894 = vst [vmem:[%s228 + $0x238] sm:$0xff] %v1781
      %1895 = vst [vmem:[%s228 + $0x240] sm:$0xff] %v1782
      %1896 = vst [vmem:[%s228 + $0x248] sm:$0xff] %v1783
      %1897 = vst [vmem:[%s228 + $0x250] sm:$0xff] %v1784
      %1898 = vst [vmem:[%s228 + $0x258] sm:$0xff] %v1785
      %1899 = vst.msk [vmem:[%s228 + $0x260] sm:$0xff] %vm1828, %v1786
      %1900 = vst [vmem:[%s228 + $0x268] sm:$0xff] %v1787
      %1901 = vst [vmem:[%s228 + $0x270] sm:$0xff] %v1788
      %1902 = vst [vmem:[%s228 + $0x278] sm:$0xff] %v1789
      %1903 = vst [vmem:[%s228 + $0x280] sm:$0xff] %v1790
      %1904 = vst [vmem:[%s228 + $0x288] sm:$0xff] %v1791
      %1905 = vst [vmem:[%s228 + $0x290] sm:$0xff] %v1792
      %1906 = vst.msk [vmem:[%s228 + $0x298] sm:$0xff] %vm1828, %v1793
      %1907 = vst [vmem:[%s228 + $0x2a0] sm:$0xff] %v1794
      %1908 = vst [vmem:[%s228 + $0x2a8] sm:$0xff] %v1795
      %1909 = vst [vmem:[%s228 + $0x2b0] sm:$0xff] %v1796
      %1910 = vst [vmem:[%s228 + $0x2b8] sm:$0xff] %v1797
      %1911 = vst [vmem:[%s228 + $0x2c0] sm:$0xff] %v1798
      %1912 = vst [vmem:[%s228 + $0x2c8] sm:$0xff] %v1799
      %1913 = vst.msk [vmem:[%s228 + $0x2d0] sm:$0xff] %vm1828, %v1800
      %1914 = vst [vmem:[%s228 + $0x2d8] sm:$0xff] %v1801
      %1915 = vst [vmem:[%s228 + $0x2e0] sm:$0xff] %v1802
      %1916 = vst [vmem:[%s228 + $0x2e8] sm:$0xff] %v1803
      %1917 = vst [vmem:[%s228 + $0x2f0] sm:$0xff] %v1804
      %1918 = vst [vmem:[%s228 + $0x2f8] sm:$0xff] %v1805
      %1919 = vst [vmem:[%s228 + $0x300] sm:$0xff] %v1806
      %1920 = vst.msk [vmem:[%s228 + $0x308] sm:$0xff] %vm1828, %v1807
      %1921 = vst [vmem:[%s228 + $0x310] sm:$0xff] %v1808
      %1922 = vst [vmem:[%s228 + $0x318] sm:$0xff] %v1809
      %1923 = vst [vmem:[%s228 + $0x320] sm:$0xff] %v1810
      %1924 = vst [vmem:[%s228 + $0x328] sm:$0xff] %v1811
      %1925 = vst [vmem:[%s228 + $0x330] sm:$0xff] %v1812
      %1926 = vst [vmem:[%s228 + $0x338] sm:$0xff] %v1813
      %1927 = vst.msk [vmem:[%s228 + $0x340] sm:$0xff] %vm1828, %v1814
      %1928 = vst [vmem:[%s228 + $0x348] sm:$0xff] %v1815
      %1929 = vst [vmem:[%s228 + $0x350] sm:$0xff] %v1816
      %1930 = vst [vmem:[%s228 + $0x358] sm:$0xff] %v1817
      %1931 = vst [vmem:[%s228 + $0x360] sm:$0xff] %v1818
      %1932 = vst [vmem:[%s228 + $0x368] sm:$0xff] %v1819
      %1933 = vst [vmem:[%s228 + $0x370] sm:$0xff] %v1820
      %1934 = vst.msk [vmem:[%s228 + $0x378] sm:$0xff] %vm1828, %v1821
      %s1935 = smul.u32 16, %s16
      %p1936 = scmp.lt.s32.totalorder %s1935, 31
      %s1937 = scalar_select %p1936, %s1935, 31
      %s1938 = smul.addr %s1937, 7
      %s1939 = smul.addr %s1938, 8
      %s1940 = scalar_lea.vmem %s5, %s1939
      // Predicated region
      $region41: #{tpu_custom_call.1} parent=39 // pred_check
        %p1941 = pneg %p144
      $region42: #{tpu_custom_call.1} parent=39 // pred_check_branch
        %1943 = sbr.rel (%p1941) target = $region44
      $region43: #{tpu_custom_call.1} parent=39 // pred_region
        %s1944 = smul.u32 16, %s16
      $region44: #{tpu_custom_call.1} parent=39 // pred_fallthru
        _
    $region40: #{tpu_custom_call.1} parent=5 // pred_fallthru
      _
    %p1945 = scmp.le.s32.totalorder 2, %s11
    // Predicated region
    $region45: #{tpu_custom_call.1} parent=5 // pred_check
      %p1946 = pneg %p1945
    $region46: #{tpu_custom_call.1} parent=5 // pred_check_branch
      %1948 = sbr.rel (%p1946) target = $region48
    $region47: #{tpu_custom_call.1} parent=5 // pred_region
      %s1949 = ssub.s32 %s11, 2
      // Predicated region
      $region49: #{tpu_custom_call.1} parent=47 // pred_check
        %p1950 = pneg %p150
      $region50: #{tpu_custom_call.1} parent=47 // pred_check_branch
        %1952 = sbr.rel (%p1950) target = $region52
      $region51: #{tpu_custom_call.1} parent=47 // pred_region
        %s1953 = smul.u32 16, %s17
        %p1954 = scmp.lt.s32.totalorder %s1953, 31
        %s1955 = scalar_select %p1954, %s1953, 31
        %s1956 = smul.addr %s1955, 7
        %s1957 = smul.addr %s1956, 8
        %s1958 = scalar_lea.vmem %s5, %s1957
      $region52: #{tpu_custom_call.1} parent=47 // pred_fallthru
        _
    $region48: #{tpu_custom_call.1} parent=5 // pred_fallthru
      _
  $region6: #{tpu_custom_call.1} parent=0 // loop_footer
    %s15 = sadd.s32 1, %s11
  $region7: #{tpu_custom_call.1} parent=0 // loop_footer_branch
    %10 = sbr.rel target = $region3
  $region8: #{tpu_custom_call.1} parent=0 // loop_exit
    _

</llo_original>
